<compile_context>
chip_gen: v7x
topology: tpu7x:2x2x1
jax: 0.10.0
libtpu: 0.0.40
codegen_flags: <defaults>
</compile_context>

<pallas_src>
import jax
import jax.numpy as jnp
import numpy as np
from jax.experimental import pallas as pl
from jax.experimental.pallas import tpu as pltpu

BN_EPS = 1e-5
_HI = jax.lax.Precision.HIGHEST


def _round_up(x, m):
    return (x + m - 1) // m * m


def _pack_params(w, bmat, v, gamma, beta, B, C, N, T):
    """Pack all matrix parameters into one 8-row-aligned f32 slab (one DMA).

    Every block the kernel reads is already in its final (pre-broadcast /
    pre-tiled / block-diagonal) shape, so the kernel never does per-row
    sublane extraction or in-kernel broadcasts of parameters.
    """
    BT = B * T
    W = max(C, T, BT)

    R_W = 0                              # w                    (N, C)
    R_V = _round_up(R_W + N, 8)          # kron(I_B, v)         (B*T, B*T)
    R_B = _round_up(R_V + BT, 8)         # b tiled over batch   (B*T, T)
    R_G = _round_up(R_B + BT, 8)         # gamma broadcast      (B*T, T)
    R_E = _round_up(R_G + BT, 8)         # beta broadcast       (B*T, T)
    n_rows = _round_up(R_E + BT, 8)

    slab = jnp.zeros((n_rows, W), jnp.float32)

    def put(s, r, x):
        x = jnp.asarray(x, jnp.float32)
        return s.at[r:r + x.shape[0], 0:x.shape[1]].set(x)

    vblk = jnp.kron(jnp.eye(B, dtype=jnp.float32),
                    jnp.asarray(v, jnp.float32).reshape(T, T))
    slab = put(slab, R_W, jnp.asarray(w, jnp.float32).reshape(N, C))
    slab = put(slab, R_V, vblk)
    slab = put(slab, R_B, jnp.tile(jnp.asarray(bmat, jnp.float32).reshape(T, T), (B, 1)))
    slab = put(slab, R_G, jnp.broadcast_to(jnp.asarray(gamma, jnp.float32).reshape(1, T), (BT, T)))
    slab = put(slab, R_E, jnp.broadcast_to(jnp.asarray(beta, jnp.float32).reshape(1, T), (BT, T)))
    return slab, (R_W, R_V, R_B, R_G, R_E)


def _make_tatt_kernel(B, C, N, T, rows):
    """Build the kernel closed over the (static) problem sizes."""
    R_W, R_V, R_B, R_G, R_E = rows
    BT = B * T

    def kernel(scal_ref, sf1_ref, sf2_ref, p_ref, out_ref):
        # --- conv1 (1x1 over c_in) on the lane-dense (B*T, C*N) view --------
        # f1[(b,t), n] = sum_c seq[b,c,n,t] * w1[c]
        # C unrolled scalar(SMEM)-broadcast FMAs on the VPU; no MXU, no bf16.
        sf1 = sf1_ref[...]                                   # (B*T, C*N) f32
        f1 = sf1[:, 0:N] * scal_ref[0]
        for c in range(1, C):
            f1 = f1 + sf1[:, c * N:(c + 1) * N] * scal_ref[c]

        # --- conv2 (1x1 over num_nodes) on the lane-dense (B*C, N*T) view ---
        # f2[(b,c), t] = sum_n seq[b,c,n,t] * w2[n]
        sf2 = sf2_ref[...]                                   # (B*C, N*T) f32
        f2 = sf2[:, 0:T] * scal_ref[C]
        for n in range(1, N):
            f2 = f2 + sf2[:, n * T:(n + 1) * T] * scal_ref[C + n]

        # --- f1 @ w: one small f32 dot (K = N).  At real sizes (C, N >= 128)
        # this is where proper MXU tiling would go; here it stays a single op.
        w = p_ref[R_W:R_W + N, 0:C]                          # (N, C)
        f1w = jnp.dot(f1, w, preferred_element_type=jnp.float32,
                      precision=_HI)                         # (B*T, C)

        # --- s = (f1 @ w) @ f2: K = C is tiny, so unrolled rank-1 f32 FMAs
        # on the VPU per batch element instead of a <1%-utilized MXU call.
        s_rows = []
        for b in range(B):
            sb = f1w[b * T:(b + 1) * T, 0:1] * f2[b * C:b * C + 1, :]
            for c in range(1, C):
                sb = sb + f1w[b * T:(b + 1) * T, c:c + 1] * f2[b * C + c:b * C + c + 1, :]
            s_rows.append(sb)
        s2d = jnp.concatenate(s_rows, axis=0) if B > 1 else s_rows[0]   # (B*T, T)

        sig = jax.nn.sigmoid(s2d + p_ref[R_B:R_B + BT, 0:T])            # b pre-tiled

        # --- v @ sig: single MXU call against wrapper-built kron(I_B, v);
        # result is produced directly in the (rows=(b,i), lanes=k) layout
        # that BN + softmax need -> no transposes / reshapes here.
        vblk = p_ref[R_V:R_V + BT, 0:BT]                      # (B*T, B*T)
        logits = jnp.dot(vblk, sig, preferred_element_type=jnp.float32,
                         precision=_HI)                       # (B*T, T)

        # --- BatchNorm1d(T): channel = k, batch stats over (b, i);
        # two-pass variance for numerical robustness.
        # TODO(synk): running-mean/var tracking and eval-mode BN are not
        # modeled (training-mode batch statistics only, as in the forward).
        mean = jnp.mean(logits, axis=0, keepdims=True)        # (1, T)
        cent = logits - mean
        var = jnp.mean(cent * cent, axis=0, keepdims=True)
        xn = (cent * jax.lax.rsqrt(var + BN_EPS) * p_ref[R_G:R_G + BT, 0:T]
              + p_ref[R_E:R_E + BT, 0:T])

        # --- Softmax over k with exact normalization (rows sum to 1).
        # TODO(synk): reference does softmax(logits + B, -1) with `B` undefined
        # (NameError in PyTorch); resolved as softmax(normed, -1).
        m = jnp.max(xn, axis=-1, keepdims=True)
        e = jnp.exp(xn - m)
        out_ref[...] = e / jnp.sum(e, axis=-1, keepdims=True)

    return kernel


def tatt_forward(seq, conv1_w, conv2_w, w, b, v, gamma, beta):
    B, C, N, T = seq.shape
    seq = jnp.asarray(seq, jnp.float32)

    # Wrapper-side layout plumbing: both seq views are built by XLA outside
    # the kernel (one transpose + two contiguous reshapes), so the kernel
    # never relays out seq across the (8,128) tile.
    seq_f1 = jnp.transpose(seq, (0, 3, 1, 2)).reshape(B * T, C * N)  # rows=(b,t), lanes=(c,n)
    seq_f2 = seq.reshape(B * C, N * T)                               # rows=(b,c), lanes=(n,t)

    # Per-channel conv weights as SMEM scalars (no VMEM sublane extraction).
    scal = jnp.concatenate([jnp.asarray(conv1_w, jnp.float32).reshape(C),
                            jnp.asarray(conv2_w, jnp.float32).reshape(N)])

    params, rows = _pack_params(w, b, v, gamma, beta, B, C, N, T)
    kernel = _make_tatt_kernel(B, C, N, T, rows)

    flops = (2 * B * T * C * N          # conv1
             + 2 * B * C * N * T        # conv2
             + 2 * B * T * N * C        # f1 @ w
             + 2 * B * T * C * T        # s
             + 2 * B * T * (B * T) * T  # kron(I_B, v) @ sig
             + 10 * B * T * T)          # BN + softmax arithmetic
    transcendentals = 2 * B * T * T + T
    bytes_accessed = 4 * (seq_f1.size + seq_f2.size + params.size
                          + scal.size + B * T * T)

    out2d = pl.pallas_call(
        kernel,
        out_shape=jax.ShapeDtypeStruct((B * T, T), jnp.float32),
        grid=(1,),
        in_specs=[
            pl.BlockSpec(memory_space=pltpu.MemorySpace.SMEM),   # conv scalars
            pl.BlockSpec((B * T, C * N), lambda i: (0, 0)),      # seq view for conv1
            pl.BlockSpec((B * C, N * T), lambda i: (0, 0)),      # seq view for conv2
            pl.BlockSpec(params.shape, lambda i: (0, 0)),        # packed params
        ],
        out_specs=pl.BlockSpec((B * T, T), lambda i: (0, 0)),
        compiler_params=pltpu.CompilerParams(
            dimension_semantics=("arbitrary",)),
        cost_estimate=pl.CostEstimate(flops=flops,
                                      transcendentals=transcendentals,
                                      bytes_accessed=bytes_accessed),
    )(scal, seq_f1, seq_f2, params)

    # Free, contiguous reshape back to (B, T, T) outside the kernel.
    return out2d.reshape(B, T, T)


def tatt_reference(seq, conv1_w, conv2_w, w, b, v, gamma, beta):
    """Plain-JAX f32/HIGHEST reference mirroring the PyTorch forward."""
    Bsz, C, N, T = seq.shape
    w1 = conv1_w.reshape(1, C, 1, 1)
    w2 = conv2_w.reshape(1, 1, N, 1)
    a = jnp.sum(seq * w1, axis=1)                          # (B, N, T)
    f1 = jnp.transpose(a, (0, 2, 1))                       # (B, T, N)
    f2 = jnp.sum(seq * w2, axis=2)                         # (B, C, T)
    f1w = jnp.einsum('btn,nc->btc', f1, w, precision=_HI)
    s = jnp.einsum('btc,bcu->btu', f1w, f2, precision=_HI)
    logits = jax.nn.sigmoid(s + b[None])
    logits = jnp.einsum('ij,bjk->bik', v, logits, precision=_HI)
    mean = jnp.mean(logits, axis=(0, 1), keepdims=True)
    var = jnp.mean((logits - mean) ** 2, axis=(0, 1), keepdims=True)
    normed = (logits - mean) * jax.lax.rsqrt(var + BN_EPS) * gamma.reshape(1, 1, T) \
             + beta.reshape(1, 1, T)
    return jax.nn.softmax(normed, axis=-1)


if __name__ == "__main__":
    # Module hyper-params (small, consistent with the forward's shape algebra).
    Bsz, c_in, num_nodes, tem_size = 2, 4, 16, 16

    key = jax.random.PRNGKey(0)
    k_seq, k_c1, k_c2, k_w, k_v = jax.random.split(key, 5)

    seq = jax.random.normal(k_seq, (Bsz, c_in, num_nodes, tem_size), jnp.float32)

    # Deterministic parameter init (matching the __init__ shapes; synthetic values).
    conv1_w = jax.random.uniform(k_c1, (1, c_in, 1, 1), jnp.float32, -1.0, 1.0) / np.sqrt(c_in)
    conv2_w = jax.random.uniform(k_c2, (1, num_nodes, 1, 1), jnp.float32, -1.0, 1.0) / np.sqrt(num_nodes)
    lim_w = float(np.sqrt(6.0 / (num_nodes + c_in)))           # xavier_uniform
    w = jax.random.uniform(k_w, (num_nodes, c_in), jnp.float32, -lim_w, lim_w)
    b = jnp.zeros((tem_size, tem_size), jnp.float32)
    lim_v = float(np.sqrt(6.0 / (tem_size + tem_size)))        # xavier_uniform
    v = jax.random.uniform(k_v, (tem_size, tem_size), jnp.float32, -lim_v, lim_v)
    gamma = jnp.ones((tem_size,), jnp.float32)                 # BatchNorm1d weight
    beta = jnp.zeros((tem_size,), jnp.float32)                 # BatchNorm1d bias

    out = tatt_forward(seq, conv1_w, conv2_w, w, b, v, gamma, beta)
    out = jax.block_until_ready(out)

    ref = tatt_reference(seq, conv1_w, conv2_w, w, b, v, gamma, beta)
    # Full-f32 kernel (no bf16 MXU operands, exact softmax normalization), so
    # only transcendental / accumulation-order differences remain.
    np.testing.assert_allclose(np.asarray(out), np.asarray(ref), rtol=2e-3, atol=2e-5)

    assert out.shape == (Bsz, tem_size, tem_size)
    print("KERNEL_OK")
</pallas_src>

<mosaic_0001>
module attributes {stable_mosaic.version = 11 : i64} {
  func.func @kernel(%arg0: i32, %arg1: memref<20xf32, #tpu.memory_space<smem>>, %arg2: memref<32x64xf32, #tpu.memory_space<vmem>>, %arg3: memref<8x256xf32, #tpu.memory_space<vmem>>, %arg4: memref<144x32xf32, #tpu.memory_space<vmem>>, %arg5: memref<32x16xf32, #tpu.memory_space<vmem>>) attributes {dimension_semantics = [#tpu.dimension_semantics<arbitrary>], iteration_bounds = array<i64: 1>, scalar_prefetch = 0 : i64, scratch_operands = 0 : i64, tpu.core_type = #tpu.core_type<tc>, window_params = [{transform_indices = @transform_0, window_bounds = array<i64: 20>}, {pipeline_mode = #tpu.pipeline_mode<synchronous>, transform_indices = @transform_1, window_bounds = array<i64: 32, 64>}, {pipeline_mode = #tpu.pipeline_mode<synchronous>, transform_indices = @transform_2, window_bounds = array<i64: 8, 256>}, {pipeline_mode = #tpu.pipeline_mode<synchronous>, transform_indices = @transform_3, window_bounds = array<i64: 144, 32>}, {pipeline_mode = #tpu.pipeline_mode<synchronous>, transform_indices = @transform_4, window_bounds = array<i64: 32, 16>}]} {
    %c0 = arith.constant 0 : index
    %c0_0 = arith.constant 0 : index
    %0 = vector.load %arg2[%c0, %c0_0] : memref<32x64xf32, #tpu.memory_space<vmem>>, vector<32x64xf32>
    %1 = vector.extract_strided_slice %0 {offsets = [0, 0], sizes = [32, 16], strides = [1, 1]} : vector<32x64xf32> to vector<32x16xf32>
    %c0_1 = arith.constant 0 : index
    %2 = memref.load %arg1[%c0_1] : memref<20xf32, #tpu.memory_space<smem>>
    %3 = vector.broadcast %2 : f32 to vector<32x16xf32>
    %4 = arith.mulf %1, %3 : vector<32x16xf32>
    %5 = vector.extract_strided_slice %0 {offsets = [0, 16], sizes = [32, 16], strides = [1, 1]} : vector<32x64xf32> to vector<32x16xf32>
    %c1 = arith.constant 1 : index
    %6 = memref.load %arg1[%c1] : memref<20xf32, #tpu.memory_space<smem>>
    %7 = vector.broadcast %6 : f32 to vector<32x16xf32>
    %8 = arith.mulf %5, %7 : vector<32x16xf32>
    %9 = arith.addf %4, %8 : vector<32x16xf32>
    %10 = vector.extract_strided_slice %0 {offsets = [0, 32], sizes = [32, 16], strides = [1, 1]} : vector<32x64xf32> to vector<32x16xf32>
    %c2 = arith.constant 2 : index
    %11 = memref.load %arg1[%c2] : memref<20xf32, #tpu.memory_space<smem>>
    %12 = vector.broadcast %11 : f32 to vector<32x16xf32>
    %13 = arith.mulf %10, %12 : vector<32x16xf32>
    %14 = arith.addf %9, %13 : vector<32x16xf32>
    %15 = vector.extract_strided_slice %0 {offsets = [0, 48], sizes = [32, 16], strides = [1, 1]} : vector<32x64xf32> to vector<32x16xf32>
    %c3 = arith.constant 3 : index
    %16 = memref.load %arg1[%c3] : memref<20xf32, #tpu.memory_space<smem>>
    %17 = vector.broadcast %16 : f32 to vector<32x16xf32>
    %18 = arith.mulf %15, %17 : vector<32x16xf32>
    %19 = arith.addf %14, %18 : vector<32x16xf32>
    %c0_2 = arith.constant 0 : index
    %c0_3 = arith.constant 0 : index
    %20 = vector.load %arg3[%c0_2, %c0_3] : memref<8x256xf32, #tpu.memory_space<vmem>>, vector<8x256xf32>
    %21 = vector.extract_strided_slice %20 {offsets = [0, 0], sizes = [8, 16], strides = [1, 1]} : vector<8x256xf32> to vector<8x16xf32>
    %c4 = arith.constant 4 : index
    %22 = memref.load %arg1[%c4] : memref<20xf32, #tpu.memory_space<smem>>
    %23 = vector.broadcast %22 : f32 to vector<8x16xf32>
    %24 = arith.mulf %21, %23 : vector<8x16xf32>
    %25 = vector.extract_strided_slice %20 {offsets = [0, 16], sizes = [8, 16], strides = [1, 1]} : vector<8x256xf32> to vector<8x16xf32>
    %c5 = arith.constant 5 : index
    %26 = memref.load %arg1[%c5] : memref<20xf32, #tpu.memory_space<smem>>
    %27 = vector.broadcast %26 : f32 to vector<8x16xf32>
    %28 = arith.mulf %25, %27 : vector<8x16xf32>
    %29 = arith.addf %24, %28 : vector<8x16xf32>
    %30 = vector.extract_strided_slice %20 {offsets = [0, 32], sizes = [8, 16], strides = [1, 1]} : vector<8x256xf32> to vector<8x16xf32>
    %c6 = arith.constant 6 : index
    %31 = memref.load %arg1[%c6] : memref<20xf32, #tpu.memory_space<smem>>
    %32 = vector.broadcast %31 : f32 to vector<8x16xf32>
    %33 = arith.mulf %30, %32 : vector<8x16xf32>
    %34 = arith.addf %29, %33 : vector<8x16xf32>
    %35 = vector.extract_strided_slice %20 {offsets = [0, 48], sizes = [8, 16], strides = [1, 1]} : vector<8x256xf32> to vector<8x16xf32>
    %c7 = arith.constant 7 : index
    %36 = memref.load %arg1[%c7] : memref<20xf32, #tpu.memory_space<smem>>
    %37 = vector.broadcast %36 : f32 to vector<8x16xf32>
    %38 = arith.mulf %35, %37 : vector<8x16xf32>
    %39 = arith.addf %34, %38 : vector<8x16xf32>
    %40 = vector.extract_strided_slice %20 {offsets = [0, 64], sizes = [8, 16], strides = [1, 1]} : vector<8x256xf32> to vector<8x16xf32>
    %c8 = arith.constant 8 : index
    %41 = memref.load %arg1[%c8] : memref<20xf32, #tpu.memory_space<smem>>
    %42 = vector.broadcast %41 : f32 to vector<8x16xf32>
    %43 = arith.mulf %40, %42 : vector<8x16xf32>
    %44 = arith.addf %39, %43 : vector<8x16xf32>
    %45 = vector.extract_strided_slice %20 {offsets = [0, 80], sizes = [8, 16], strides = [1, 1]} : vector<8x256xf32> to vector<8x16xf32>
    %c9 = arith.constant 9 : index
    %46 = memref.load %arg1[%c9] : memref<20xf32, #tpu.memory_space<smem>>
    %47 = vector.broadcast %46 : f32 to vector<8x16xf32>
    %48 = arith.mulf %45, %47 : vector<8x16xf32>
    %49 = arith.addf %44, %48 : vector<8x16xf32>
    %50 = vector.extract_strided_slice %20 {offsets = [0, 96], sizes = [8, 16], strides = [1, 1]} : vector<8x256xf32> to vector<8x16xf32>
    %c10 = arith.constant 10 : index
    %51 = memref.load %arg1[%c10] : memref<20xf32, #tpu.memory_space<smem>>
    %52 = vector.broadcast %51 : f32 to vector<8x16xf32>
    %53 = arith.mulf %50, %52 : vector<8x16xf32>
    %54 = arith.addf %49, %53 : vector<8x16xf32>
    %55 = vector.extract_strided_slice %20 {offsets = [0, 112], sizes = [8, 16], strides = [1, 1]} : vector<8x256xf32> to vector<8x16xf32>
    %c11 = arith.constant 11 : index
    %56 = memref.load %arg1[%c11] : memref<20xf32, #tpu.memory_space<smem>>
    %57 = vector.broadcast %56 : f32 to vector<8x16xf32>
    %58 = arith.mulf %55, %57 : vector<8x16xf32>
    %59 = arith.addf %54, %58 : vector<8x16xf32>
    %60 = vector.extract_strided_slice %20 {offsets = [0, 128], sizes = [8, 16], strides = [1, 1]} : vector<8x256xf32> to vector<8x16xf32>
    %c12 = arith.constant 12 : index
    %61 = memref.load %arg1[%c12] : memref<20xf32, #tpu.memory_space<smem>>
    %62 = vector.broadcast %61 : f32 to vector<8x16xf32>
    %63 = arith.mulf %60, %62 : vector<8x16xf32>
    %64 = arith.addf %59, %63 : vector<8x16xf32>
    %65 = vector.extract_strided_slice %20 {offsets = [0, 144], sizes = [8, 16], strides = [1, 1]} : vector<8x256xf32> to vector<8x16xf32>
    %c13 = arith.constant 13 : index
    %66 = memref.load %arg1[%c13] : memref<20xf32, #tpu.memory_space<smem>>
    %67 = vector.broadcast %66 : f32 to vector<8x16xf32>
    %68 = arith.mulf %65, %67 : vector<8x16xf32>
    %69 = arith.addf %64, %68 : vector<8x16xf32>
    %70 = vector.extract_strided_slice %20 {offsets = [0, 160], sizes = [8, 16], strides = [1, 1]} : vector<8x256xf32> to vector<8x16xf32>
    %c14 = arith.constant 14 : index
    %71 = memref.load %arg1[%c14] : memref<20xf32, #tpu.memory_space<smem>>
    %72 = vector.broadcast %71 : f32 to vector<8x16xf32>
    %73 = arith.mulf %70, %72 : vector<8x16xf32>
    %74 = arith.addf %69, %73 : vector<8x16xf32>
    %75 = vector.extract_strided_slice %20 {offsets = [0, 176], sizes = [8, 16], strides = [1, 1]} : vector<8x256xf32> to vector<8x16xf32>
    %c15 = arith.constant 15 : index
    %76 = memref.load %arg1[%c15] : memref<20xf32, #tpu.memory_space<smem>>
    %77 = vector.broadcast %76 : f32 to vector<8x16xf32>
    %78 = arith.mulf %75, %77 : vector<8x16xf32>
    %79 = arith.addf %74, %78 : vector<8x16xf32>
    %80 = vector.extract_strided_slice %20 {offsets = [0, 192], sizes = [8, 16], strides = [1, 1]} : vector<8x256xf32> to vector<8x16xf32>
    %c16 = arith.constant 16 : index
    %81 = memref.load %arg1[%c16] : memref<20xf32, #tpu.memory_space<smem>>
    %82 = vector.broadcast %81 : f32 to vector<8x16xf32>
    %83 = arith.mulf %80, %82 : vector<8x16xf32>
    %84 = arith.addf %79, %83 : vector<8x16xf32>
    %85 = vector.extract_strided_slice %20 {offsets = [0, 208], sizes = [8, 16], strides = [1, 1]} : vector<8x256xf32> to vector<8x16xf32>
    %c17 = arith.constant 17 : index
    %86 = memref.load %arg1[%c17] : memref<20xf32, #tpu.memory_space<smem>>
    %87 = vector.broadcast %86 : f32 to vector<8x16xf32>
    %88 = arith.mulf %85, %87 : vector<8x16xf32>
    %89 = arith.addf %84, %88 : vector<8x16xf32>
    %90 = vector.extract_strided_slice %20 {offsets = [0, 224], sizes = [8, 16], strides = [1, 1]} : vector<8x256xf32> to vector<8x16xf32>
    %c18 = arith.constant 18 : index
    %91 = memref.load %arg1[%c18] : memref<20xf32, #tpu.memory_space<smem>>
    %92 = vector.broadcast %91 : f32 to vector<8x16xf32>
    %93 = arith.mulf %90, %92 : vector<8x16xf32>
    %94 = arith.addf %89, %93 : vector<8x16xf32>
    %95 = vector.extract_strided_slice %20 {offsets = [0, 240], sizes = [8, 16], strides = [1, 1]} : vector<8x256xf32> to vector<8x16xf32>
    %c19 = arith.constant 19 : index
    %96 = memref.load %arg1[%c19] : memref<20xf32, #tpu.memory_space<smem>>
    %97 = vector.broadcast %96 : f32 to vector<8x16xf32>
    %98 = arith.mulf %95, %97 : vector<8x16xf32>
    %99 = arith.addf %94, %98 : vector<8x16xf32>
    %c0_4 = arith.constant 0 : index
    %c0_5 = arith.constant 0 : index
    %100 = vector.load %arg4[%c0_4, %c0_5] : memref<144x32xf32, #tpu.memory_space<vmem>>, vector<16x4xf32>
    %cst = arith.constant dense<0.000000e+00> : vector<32x4xf32>
    %101 = tpu.matmul %19, %100, %cst {dimension_numbers = #tpu.dot_dimension_numbers<[1], [0], [0], [1], [0, 0, 1, 1], [], []>, precision = #tpu.contract_precision<fp32>} : vector<32x16xf32>, vector<16x4xf32>, vector<32x4xf32> -> vector<32x4xf32>
    %102 = vector.extract_strided_slice %101 {offsets = [0, 0], sizes = [16, 1], strides = [1, 1]} : vector<32x4xf32> to vector<16x1xf32>
    %103 = vector.extract_strided_slice %99 {offsets = [0, 0], sizes = [1, 16], strides = [1, 1]} : vector<8x16xf32> to vector<1x16xf32>
    %104 = vector.broadcast %102 : vector<16x1xf32> to vector<16x16xf32>
    %105 = vector.broadcast %103 : vector<1x16xf32> to vector<16x16xf32>
    %106 = arith.mulf %104, %105 : vector<16x16xf32>
    %107 = vector.extract_strided_slice %101 {offsets = [0, 1], sizes = [16, 1], strides = [1, 1]} : vector<32x4xf32> to vector<16x1xf32>
    %108 = vector.extract_strided_slice %99 {offsets = [1, 0], sizes = [1, 16], strides = [1, 1]} : vector<8x16xf32> to vector<1x16xf32>
    %109 = vector.broadcast %107 : vector<16x1xf32> to vector<16x16xf32>
    %110 = vector.broadcast %108 : vector<1x16xf32> to vector<16x16xf32>
    %111 = arith.mulf %109, %110 : vector<16x16xf32>
    %112 = arith.addf %106, %111 : vector<16x16xf32>
    %113 = vector.extract_strided_slice %101 {offsets = [0, 2], sizes = [16, 1], strides = [1, 1]} : vector<32x4xf32> to vector<16x1xf32>
    %114 = vector.extract_strided_slice %99 {offsets = [2, 0], sizes = [1, 16], strides = [1, 1]} : vector<8x16xf32> to vector<1x16xf32>
    %115 = vector.broadcast %113 : vector<16x1xf32> to vector<16x16xf32>
    %116 = vector.broadcast %114 : vector<1x16xf32> to vector<16x16xf32>
    %117 = arith.mulf %115, %116 : vector<16x16xf32>
    %118 = arith.addf %112, %117 : vector<16x16xf32>
    %119 = vector.extract_strided_slice %101 {offsets = [0, 3], sizes = [16, 1], strides = [1, 1]} : vector<32x4xf32> to vector<16x1xf32>
    %120 = vector.extract_strided_slice %99 {offsets = [3, 0], sizes = [1, 16], strides = [1, 1]} : vector<8x16xf32> to vector<1x16xf32>
    %121 = vector.broadcast %119 : vector<16x1xf32> to vector<16x16xf32>
    %122 = vector.broadcast %120 : vector<1x16xf32> to vector<16x16xf32>
    %123 = arith.mulf %121, %122 : vector<16x16xf32>
    %124 = arith.addf %118, %123 : vector<16x16xf32>
    %125 = vector.extract_strided_slice %101 {offsets = [16, 0], sizes = [16, 1], strides = [1, 1]} : vector<32x4xf32> to vector<16x1xf32>
    %126 = vector.extract_strided_slice %99 {offsets = [4, 0], sizes = [1, 16], strides = [1, 1]} : vector<8x16xf32> to vector<1x16xf32>
    %127 = vector.broadcast %125 : vector<16x1xf32> to vector<16x16xf32>
    %128 = vector.broadcast %126 : vector<1x16xf32> to vector<16x16xf32>
    %129 = arith.mulf %127, %128 : vector<16x16xf32>
    %130 = vector.extract_strided_slice %101 {offsets = [16, 1], sizes = [16, 1], strides = [1, 1]} : vector<32x4xf32> to vector<16x1xf32>
    %131 = vector.extract_strided_slice %99 {offsets = [5, 0], sizes = [1, 16], strides = [1, 1]} : vector<8x16xf32> to vector<1x16xf32>
    %132 = vector.broadcast %130 : vector<16x1xf32> to vector<16x16xf32>
    %133 = vector.broadcast %131 : vector<1x16xf32> to vector<16x16xf32>
    %134 = arith.mulf %132, %133 : vector<16x16xf32>
    %135 = arith.addf %129, %134 : vector<16x16xf32>
    %136 = vector.extract_strided_slice %101 {offsets = [16, 2], sizes = [16, 1], strides = [1, 1]} : vector<32x4xf32> to vector<16x1xf32>
    %137 = vector.extract_strided_slice %99 {offsets = [6, 0], sizes = [1, 16], strides = [1, 1]} : vector<8x16xf32> to vector<1x16xf32>
    %138 = vector.broadcast %136 : vector<16x1xf32> to vector<16x16xf32>
    %139 = vector.broadcast %137 : vector<1x16xf32> to vector<16x16xf32>
    %140 = arith.mulf %138, %139 : vector<16x16xf32>
    %141 = arith.addf %135, %140 : vector<16x16xf32>
    %142 = vector.extract_strided_slice %101 {offsets = [16, 3], sizes = [16, 1], strides = [1, 1]} : vector<32x4xf32> to vector<16x1xf32>
    %143 = vector.extract_strided_slice %99 {offsets = [7, 0], sizes = [1, 16], strides = [1, 1]} : vector<8x16xf32> to vector<1x16xf32>
    %144 = vector.broadcast %142 : vector<16x1xf32> to vector<16x16xf32>
    %145 = vector.broadcast %143 : vector<1x16xf32> to vector<16x16xf32>
    %146 = arith.mulf %144, %145 : vector<16x16xf32>
    %147 = arith.addf %141, %146 : vector<16x16xf32>
    %148 = tpu.concatenate %124, %147 in 0 : vector<16x16xf32>, vector<16x16xf32> -> vector<32x16xf32>
    %c48 = arith.constant 48 : index
    %c0_6 = arith.constant 0 : index
    %149 = vector.load %arg4[%c48, %c0_6] : memref<144x32xf32, #tpu.memory_space<vmem>>, vector<32x16xf32>
    %150 = arith.addf %148, %149 : vector<32x16xf32>
    %151 = arith.negf %150 : vector<32x16xf32>
    %152 = math.exp %151 : vector<32x16xf32>
    %cst_7 = arith.constant 1.000000e+00 : f32
    %153 = vector.broadcast %cst_7 : f32 to vector<32x16xf32>
    %154 = arith.addf %153, %152 : vector<32x16xf32>
    %155 = arith.divf %153, %154 : vector<32x16xf32>
    %c16_8 = arith.constant 16 : index
    %c0_9 = arith.constant 0 : index
    %156 = vector.load %arg4[%c16_8, %c0_9] : memref<144x32xf32, #tpu.memory_space<vmem>>, vector<32x32xf32>
    %cst_10 = arith.constant dense<0.000000e+00> : vector<32x16xf32>
    %157 = tpu.matmul %156, %155, %cst_10 {dimension_numbers = #tpu.dot_dimension_numbers<[1], [0], [0], [1], [0, 0, 1, 1], [], []>, precision = #tpu.contract_precision<fp32>} : vector<32x32xf32>, vector<32x16xf32>, vector<32x16xf32> -> vector<32x16xf32>
    %cst_11 = arith.constant dense<0.000000e+00> : vector<16xf32>
    %158 = vector.multi_reduction <add>, %157, %cst_11 [0] : vector<32x16xf32> to vector<16xf32>
    %159 = vector.shape_cast %158 : vector<16xf32> to vector<1x16xf32>
    %cst_12 = arith.constant 3.200000e+01 : f32
    %160 = vector.broadcast %cst_12 : f32 to vector<1x16xf32>
    %161 = arith.divf %159, %160 : vector<1x16xf32>
    %162 = vector.broadcast %161 : vector<1x16xf32> to vector<32x16xf32>
    %163 = arith.subf %157, %162 : vector<32x16xf32>
    %164 = arith.mulf %163, %163 : vector<32x16xf32>
    %cst_13 = arith.constant dense<0.000000e+00> : vector<16xf32>
    %165 = vector.multi_reduction <add>, %164, %cst_13 [0] : vector<32x16xf32> to vector<16xf32>
    %166 = vector.shape_cast %165 : vector<16xf32> to vector<1x16xf32>
    %cst_14 = arith.constant 3.200000e+01 : f32
    %167 = vector.broadcast %cst_14 : f32 to vector<1x16xf32>
    %168 = arith.divf %166, %167 : vector<1x16xf32>
    %cst_15 = arith.constant 9.99999974E-6 : f32
    %169 = vector.broadcast %cst_15 : f32 to vector<1x16xf32>
    %170 = arith.addf %168, %169 : vector<1x16xf32>
    %171 = math.rsqrt %170 : vector<1x16xf32>
    %172 = vector.broadcast %171 : vector<1x16xf32> to vector<32x16xf32>
    %173 = arith.mulf %163, %172 : vector<32x16xf32>
    %c80 = arith.constant 80 : index
    %c0_16 = arith.constant 0 : index
    %174 = vector.load %arg4[%c80, %c0_16] : memref<144x32xf32, #tpu.memory_space<vmem>>, vector<32x16xf32>
    %175 = arith.mulf %173, %174 : vector<32x16xf32>
    %c112 = arith.constant 112 : index
    %c0_17 = arith.constant 0 : index
    %176 = vector.load %arg4[%c112, %c0_17] : memref<144x32xf32, #tpu.memory_space<vmem>>, vector<32x16xf32>
    %177 = arith.addf %175, %176 : vector<32x16xf32>
    %cst_18 = arith.constant dense<0xFF800000> : vector<32xf32>
    %178 = vector.multi_reduction <maximumf>, %177, %cst_18 [1] : vector<32x16xf32> to vector<32xf32>
    %179 = vector.shape_cast %178 : vector<32xf32> to vector<32x1xf32>
    %180 = vector.broadcast %179 : vector<32x1xf32> to vector<32x16xf32>
    %181 = arith.subf %177, %180 : vector<32x16xf32>
    %182 = math.exp %181 : vector<32x16xf32>
    %cst_19 = arith.constant dense<0.000000e+00> : vector<32xf32>
    %183 = vector.multi_reduction <add>, %182, %cst_19 [1] : vector<32x16xf32> to vector<32xf32>
    %184 = vector.shape_cast %183 : vector<32xf32> to vector<32x1xf32>
    %185 = vector.broadcast %184 : vector<32x1xf32> to vector<32x16xf32>
    %186 = arith.divf %182, %185 : vector<32x16xf32>
    %c0_20 = arith.constant 0 : index
    %c0_21 = arith.constant 0 : index
    %187 = vector.load %arg5[%c0_20, %c0_21] : memref<32x16xf32, #tpu.memory_space<vmem>>, vector<32x16xf32>
    tpu.vector_store %arg5[%c0_20, %c0_21], %186 {strides = array<i32>} : memref<32x16xf32, #tpu.memory_space<vmem>>, vector<32x16xf32>,
    return
  }
  func.func @transform_0(%arg0: i32) -> i32 {
    %c0_i32 = arith.constant 0 : i32
    %c0_i32_0 = arith.constant 0 : i32
    return %c0_i32 : i32
  }
  func.func @transform_1(%arg0: i32) -> (i32, i32) {
    %c0_i32 = arith.constant 0 : i32
    %c0_i32_0 = arith.constant 0 : i32
    %c0_i32_1 = arith.constant 0 : i32
    return %c0_i32, %c0_i32_0 : i32, i32
  }
  func.func @transform_2(%arg0: i32) -> (i32, i32) {
    %c0_i32 = arith.constant 0 : i32
    %c0_i32_0 = arith.constant 0 : i32
    %c0_i32_1 = arith.constant 0 : i32
    return %c0_i32, %c0_i32_0 : i32, i32
  }
  func.func @transform_3(%arg0: i32) -> (i32, i32) {
    %c0_i32 = arith.constant 0 : i32
    %c0_i32_0 = arith.constant 0 : i32
    %c0_i32_1 = arith.constant 0 : i32
    return %c0_i32, %c0_i32_0 : i32, i32
  }
  func.func @transform_4(%arg0: i32) -> (i32, i32) {
    %c0_i32 = arith.constant 0 : i32
    %c0_i32_0 = arith.constant 0 : i32
    %c0_i32_1 = arith.constant 0 : i32
    return %c0_i32, %c0_i32_0 : i32, i32
  }
}

</mosaic_0001>

<llo_original>
// kernel: tpu_custom_call.1
$region0: #{tpu_custom_call.1}
  #allocation0 [shape = 'u32[]', space=smem, size = 0x4, offset = 0x4, fixed_abs, tag = 'smem constant byte address 0x4 - core index']
  #allocation1 [shape = 'u32[144,128]{1,0:T(1,128)}', space=vmem, size = 0x12000, scoped, tag = 'internal scratch']
  %s0 = inlined_call_operand.vmem [shape: f32[20], index: 0, kind: input, shape index: {}]
  %s1 = inlined_call_operand.vmem [shape: f32[32,64], index: 1, kind: input, shape index: {}]
  %s2 = inlined_call_operand.vmem [shape: f32[8,256], index: 2, kind: input, shape index: {}]
  %s3 = inlined_call_operand.vmem [shape: f32[144,32], index: 3, kind: input, shape index: {}]
  %s4 = inlined_call_operand.vmem [shape: f32[32,16], index: 4, kind: output, shape index: {}]
  %s5 = sld [smem:[#allocation0]]
  $region30: #{tpu_custom_call.1} parent=0
    _
  %s7 = ssub.s32 1, %s5
  %s8 = scalar_select 0, %s7, %s5
  $region1: #{tpu_custom_call.1} parent=0
    #allocation2 [shape = 'u8[512]{0}', space=smem, size = 0x200, scoped, tag = 'input window, operand 0, single buffered']
    #allocation3 [shape = 's32[1]{0}', space=sflag, size = 0x4, scoped, tag = 'scoped memory for tpu_custom_call.1']
    %9 = vsyncpa [#allocation3], 0
    // Predicated region
    $region2: #{tpu_custom_call.1} parent=1 // pred_check
      _
    $region3: #{tpu_custom_call.1} parent=1 // pred_check_branch
      %11 = sbr.rel (0) target = $region5
    $region4: #{tpu_custom_call.1} parent=1 // pred_region
      %s13 = ssub.s32 16, 16
      %14 = vsyncadd [#allocation3], %s13
      %s16 = sshll.u32 %s0, 4
      %s17 = int_to_ptr.vmem [resolvable:$true] %s16
      %19 = dma.vmem_to_smem %s17, 16, [#allocation2], [#allocation3]
    $region5: #{tpu_custom_call.1} parent=1 // pred_fallthru
      _
    // Predicated region
    $region6: #{tpu_custom_call.1} parent=1 // pred_check
      _
    $region7: #{tpu_custom_call.1} parent=1 // pred_check_branch
      %21 = sbr.rel (0) target = $region9
    $region8: #{tpu_custom_call.1} parent=1 // pred_region
      _
    $region9: #{tpu_custom_call.1} parent=1 // pred_fallthru
      _
    // Predicated region
    $region10: #{tpu_custom_call.1} parent=1 // pred_check
      _
    $region11: #{tpu_custom_call.1} parent=1 // pred_check_branch
      %23 = sbr.rel (0) target = $region13
    $region12: #{tpu_custom_call.1} parent=1 // pred_region
      _
    $region13: #{tpu_custom_call.1} parent=1 // pred_fallthru
      _
    // Predicated region
    $region14: #{tpu_custom_call.1} parent=1 // pred_check
      _
    $region15: #{tpu_custom_call.1} parent=1 // pred_check_branch
      %25 = sbr.rel (0) target = $region17
    $region16: #{tpu_custom_call.1} parent=1 // pred_region
      _
    $region17: #{tpu_custom_call.1} parent=1 // pred_fallthru
      _
    // Predicated region
    $region18: #{tpu_custom_call.1} parent=1 // pred_check
      _
    $region19: #{tpu_custom_call.1} parent=1 // pred_check_branch
      %27 = sbr.rel (0) target = $region21
    $region20: #{tpu_custom_call.1} parent=1 // pred_region
      %28 = dma.done [#allocation3], 16
    $region21: #{tpu_custom_call.1} parent=1 // pred_fallthru
      _
    %29 = sfence
    %v30 = vld [vmem:[%s1] sm:$0xff]
    %v31 = vld [vmem:[%s1 + $0x8] sm:$0xff]
    %v32 = vld [vmem:[%s1 + $0x10] sm:$0xff]
    %v33 = vld [vmem:[%s1 + $0x18] sm:$0xff]
    %s34 = sld [smem:[#allocation2]]
    %v35 = vstv %s34
    %v36 = vmul.f32 %v30, %v35
    %v37 = vmul.f32 %v31, %v35
    %v38 = vmul.f32 %v32, %v35
    %v39 = vmul.f32 %v33, %v35
    %s40 = sld [smem:[#allocation2 + $0x1]]
    %v41 = vstv %s40
    %v42 = vmul.f32 %v30, %v41
    %v43 = vmul.f32 %v31, %v41
    %v44 = vmul.f32 %v32, %v41
    %v45 = vmul.f32 %v33, %v41
    %50 = vrot.lane.b32.xlu0 %v42, 112
    %v51 = vpop.permute.xlu0 %50
    %52 = vrot.lane.b32.xlu0 %v43, 112
    %v53 = vpop.permute.xlu0 %52
    %54 = vrot.lane.b32.xlu0 %v44, 112
    %v55 = vpop.permute.xlu0 %54
    %56 = vrot.lane.b32.xlu0 %v45, 112
    %v57 = vpop.permute.xlu0 %56
    %v62 = vadd.f32 %v36, %v51
    %v63 = vadd.f32 %v37, %v53
    %v64 = vadd.f32 %v38, %v55
    %v65 = vadd.f32 %v39, %v57
    %s66 = sld [smem:[#allocation2 + $0x2]]
    %v67 = vstv %s66
    %v68 = vmul.f32 %v30, %v67
    %v69 = vmul.f32 %v31, %v67
    %v70 = vmul.f32 %v32, %v67
    %v71 = vmul.f32 %v33, %v67
    %76 = vrot.lane.b32.xlu0 %v68, 96
    %v77 = vpop.permute.xlu0 %76
    %78 = vrot.lane.b32.xlu0 %v69, 96
    %v79 = vpop.permute.xlu0 %78
    %80 = vrot.lane.b32.xlu0 %v70, 96
    %v81 = vpop.permute.xlu0 %80
    %82 = vrot.lane.b32.xlu0 %v71, 96
    %v83 = vpop.permute.xlu0 %82
    %v88 = vadd.f32 %v62, %v77
    %v89 = vadd.f32 %v63, %v79
    %v90 = vadd.f32 %v64, %v81
    %v91 = vadd.f32 %v65, %v83
    %s92 = sld [smem:[#allocation2 + $0x3]]
    %v93 = vstv %s92
    %v94 = vmul.f32 %v30, %v93
    %v95 = vmul.f32 %v31, %v93
    %v96 = vmul.f32 %v32, %v93
    %v97 = vmul.f32 %v33, %v93
    %102 = vrot.lane.b32.xlu0 %v94, 80
    %v103 = vpop.permute.xlu0 %102
    %104 = vrot.lane.b32.xlu0 %v95, 80
    %v105 = vpop.permute.xlu0 %104
    %106 = vrot.lane.b32.xlu0 %v96, 80
    %v107 = vpop.permute.xlu0 %106
    %108 = vrot.lane.b32.xlu0 %v97, 80
    %v109 = vpop.permute.xlu0 %108
    %v114 = vadd.f32 %v88, %v103
    %v115 = vadd.f32 %v89, %v105
    %v116 = vadd.f32 %v90, %v107
    %v117 = vadd.f32 %v91, %v109
    %v118 = vld [vmem:[%s2] sm:$0xff]
    %v119 = vld [vmem:[%s2 + $0x8] sm:$0xff]
    %s120 = sld [smem:[#allocation2 + $0x4]]
    %v121 = vstv %s120
    %v122 = vmul.f32 %v118, %v121
    %s123 = sld [smem:[#allocation2 + $0x5]]
    %v124 = vstv %s123
    %v125 = vmul.f32 %v118, %v124
    %127 = vrot.lane.b32.xlu0 %v125, 112
    %v128 = vpop.permute.xlu0 %127
    %v130 = vadd.f32 %v122, %v128
    %s131 = sld [smem:[#allocation2 + $0x6]]
    %v132 = vstv %s131
    %v133 = vmul.f32 %v118, %v132
    %135 = vrot.lane.b32.xlu0 %v133, 96
    %v136 = vpop.permute.xlu0 %135
    %v138 = vadd.f32 %v130, %v136
    %s139 = sld [smem:[#allocation2 + $0x7]]
    %v140 = vstv %s139
    %v141 = vmul.f32 %v118, %v140
    %143 = vrot.lane.b32.xlu0 %v141, 80
    %v144 = vpop.permute.xlu0 %143
    %v146 = vadd.f32 %v138, %v144
    %s147 = sld [smem:[#allocation2 + $0x8]]
    %v148 = vstv %s147
    %v149 = vmul.f32 %v118, %v148
    %151 = vrot.lane.b32.xlu0 %v149, 64
    %v152 = vpop.permute.xlu0 %151
    %v154 = vadd.f32 %v146, %v152
    %s155 = sld [smem:[#allocation2 + $0x9]]
    %v156 = vstv %s155
    %v157 = vmul.f32 %v118, %v156
    %159 = vrot.lane.b32.xlu0 %v157, 48
    %v160 = vpop.permute.xlu0 %159
    %v162 = vadd.f32 %v154, %v160
    %s163 = sld [smem:[#allocation2 + $0xa]]
    %v164 = vstv %s163
    %v165 = vmul.f32 %v118, %v164
    %167 = vrot.lane.b32.xlu0 %v165, 32
    %v168 = vpop.permute.xlu0 %167
    %v170 = vadd.f32 %v162, %v168
    %s171 = sld [smem:[#allocation2 + $0xb]]
    %v172 = vstv %s171
    %v173 = vmul.f32 %v118, %v172
    %175 = vrot.lane.b32.xlu0 %v173, 16
    %v176 = vpop.permute.xlu0 %175
    %v178 = vadd.f32 %v170, %v176
    %s179 = sld [smem:[#allocation2 + $0xc]]
    %v180 = vstv %s179
    %v181 = vmul.f32 %v119, %v180
    %v182 = vadd.f32 %v178, %v181
    %s183 = sld [smem:[#allocation2 + $0xd]]
    %v184 = vstv %s183
    %v185 = vmul.f32 %v119, %v184
    %187 = vrot.lane.b32.xlu0 %v185, 112
    %v188 = vpop.permute.xlu0 %187
    %v190 = vadd.f32 %v182, %v188
    %s191 = sld [smem:[#allocation2 + $0xe]]
    %v192 = vstv %s191
    %v193 = vmul.f32 %v119, %v192
    %195 = vrot.lane.b32.xlu0 %v193, 96
    %v196 = vpop.permute.xlu0 %195
    %v198 = vadd.f32 %v190, %v196
    %s199 = sld [smem:[#allocation2 + $0xf]]
    %v200 = vstv %s199
    %v201 = vmul.f32 %v119, %v200
    %203 = vrot.lane.b32.xlu0 %v201, 80
    %v204 = vpop.permute.xlu0 %203
    %v206 = vadd.f32 %v198, %v204
    %s207 = sld [smem:[#allocation2 + $0x10]]
    %v208 = vstv %s207
    %v209 = vmul.f32 %v119, %v208
    %211 = vrot.lane.b32.xlu0 %v209, 64
    %v212 = vpop.permute.xlu0 %211
    %v214 = vadd.f32 %v206, %v212
    %s215 = sld [smem:[#allocation2 + $0x11]]
    %v216 = vstv %s215
    %v217 = vmul.f32 %v119, %v216
    %219 = vrot.lane.b32.xlu0 %v217, 48
    %v220 = vpop.permute.xlu0 %219
    %v222 = vadd.f32 %v214, %v220
    %s223 = sld [smem:[#allocation2 + $0x12]]
    %v224 = vstv %s223
    %v225 = vmul.f32 %v119, %v224
    %227 = vrot.lane.b32.xlu0 %v225, 32
    %v228 = vpop.permute.xlu0 %227
    %v230 = vadd.f32 %v222, %v228
    %s231 = sld [smem:[#allocation2 + $0x13]]
    %v232 = vstv %s231
    %v233 = vmul.f32 %v119, %v232
    %235 = vrot.lane.b32.xlu0 %v233, 16
    %v236 = vpop.permute.xlu0 %235
    %v238 = vadd.f32 %v230, %v236
    %v239 = vld [vmem:[%s3] sm:$0xff]
    %v240 = vld [vmem:[%s3 + $0x8] sm:$0xff]
    %vm241 = vcmask 130048
    %v243 = vsel %vm241, %v114, 0
    %v246 = vsel %vm241, %v115, 0
    %v249 = vsel %vm241, %v116, 0
    %v252 = vsel %vm241, %v117, 0
    %254 = vmatprep.subr.mxu0 0.0
    %v255 = vand.u32 %v239, 4294901760
    %256 = vmatpush1.msra.mxu0 %v255
    %257 = vmatprep.subr.mxu0 0.0
    %v258 = vand.u32 %v240, 4294901760
    %259 = vmatpush1.msra.mxu0 %v258
    %260 = vmatprep.subr.mxu0 0.0
    %261 = vmatpush1.msra.mxu0 0.0
    %262 = vmatprep.subr.mxu0 0.0
    %263 = vmatpush1.msra.mxu0 0.0
    %264 = vmatprep.subr.mxu0 0.0
    %265 = vmatpush1.msra.mxu0 0.0
    %266 = vmatprep.subr.mxu0 0.0
    %267 = vmatpush1.msra.mxu0 0.0
    %268 = vmatprep.subr.mxu0 0.0
    %269 = vmatpush1.msra.mxu0 0.0
    %270 = vmatprep.subr.mxu0 0.0
    %271 = vmatpush1.msra.mxu0 0.0
    %272 = vmatprep.subr.mxu0 0.0
    %273 = vmatpush1.msra.mxu0 0.0
    %274 = vmatprep.subr.mxu0 0.0
    %275 = vmatpush1.msra.mxu0 0.0
    %276 = vmatprep.subr.mxu0 0.0
    %277 = vmatpush1.msra.mxu0 0.0
    %278 = vmatprep.subr.mxu0 0.0
    %279 = vmatpush1.msra.mxu0 0.0
    %280 = vmatprep.subr.mxu0 0.0
    %281 = vmatpush1.msra.mxu0 0.0
    %282 = vmatprep.subr.mxu0 0.0
    %283 = vmatpush1.msra.mxu0 0.0
    %284 = vmatprep.subr.mxu0 0.0
    %285 = vmatpush1.msra.mxu0 0.0
    %286 = vmatprep.subr.mxu0 0.0
    %287 = vmatpush1.msra.mxu0 0.0
    %288 = vmatprep.subr.mxu0 0.0
    %289 = vmatpush1.msra.mxu0 0.0
    %290 = vmatprep.subr.mxu0 0.0
    %291 = vmatpush1.msra.mxu0 0.0
    %292 = vmatprep.subr.mxu0 0.0
    %293 = vmatpush1.msra.mxu0 0.0
    %294 = vmatprep.subr.mxu0 0.0
    %295 = vmatpush1.msra.mxu0 0.0
    %296 = vmatprep.subr.mxu0 0.0
    %297 = vmatpush1.msra.mxu0 0.0
    %298 = vmatprep.subr.mxu0 0.0
    %299 = vmatpush1.msra.mxu0 0.0
    %300 = vmatprep.subr.mxu0 0.0
    %301 = vmatpush1.msra.mxu0 0.0
    %302 = vmatprep.subr.mxu0 0.0
    %303 = vmatpush1.msra.mxu0 0.0
    %304 = vmatprep.subr.mxu0 0.0
    %305 = vmatpush1.msra.mxu0 0.0
    %306 = vmatprep.subr.mxu0 0.0
    %307 = vmatpush1.msra.mxu0 0.0
    %308 = vmatprep.subr.mxu0 0.0
    %309 = vmatpush1.msra.mxu0 0.0
    %310 = vmatprep.subr.mxu0 0.0
    %311 = vmatpush1.msra.mxu0 0.0
    %312 = vmatprep.subr.mxu0 0.0
    %313 = vmatpush1.msra.mxu0 0.0
    %314 = vmatprep.subr.mxu0 0.0
    %315 = vmatpush1.msra.mxu0 0.0
    %316 = vmatprep.subr.mxu0 0.0
    %317 = vmatpush1.msra.mxu0 0.0
    %318 = vmatprep.subr.mxu0 0.0
    %319 = vmatpush1.msra.mxu0 0.0
    %320 = vmatprep.mubr.f32.mxu0 0.0
    %v321 = vand.u32 %v243, 4294901760
    %v322 = vsub.f32 %v243, %v321
    %v323 = vand.u32 %v322, 4294901760
    %v324 = vsub.f32 %v322, %v323
    %v325 = vand.u32 %v324, 4294901760
    %326 = vmatmul.mubr.f32.gmra.mrb[0].mxu0 %v325
    %v327 = vpop.f32.mrb[0].mxu0
    %v328 = vadd.f32 0.0, %v327
    %v329 = vpop.f32.mrb[0].mxu0
    %330 = vmatprep.mubr.f32.mxu0 0.0
    %v331 = vand.u32 %v246, 4294901760
    %v332 = vsub.f32 %v246, %v331
    %v333 = vand.u32 %v332, 4294901760
    %v334 = vsub.f32 %v332, %v333
    %v335 = vand.u32 %v334, 4294901760
    %336 = vmatmul.mubr.f32.gmra.mrb[0].mxu0 %v335
    %v337 = vpop.f32.mrb[0].mxu0
    %v338 = vadd.f32 0.0, %v337
    %v339 = vpop.f32.mrb[0].mxu0
    %340 = vmatprep.mubr.f32.mxu0 0.0
    %v341 = vand.u32 %v249, 4294901760
    %v342 = vsub.f32 %v249, %v341
    %v343 = vand.u32 %v342, 4294901760
    %v344 = vsub.f32 %v342, %v343
    %v345 = vand.u32 %v344, 4294901760
    %346 = vmatmul.mubr.f32.gmra.mrb[0].mxu0 %v345
    %v347 = vpop.f32.mrb[0].mxu0
    %v348 = vadd.f32 0.0, %v347
    %v349 = vpop.f32.mrb[0].mxu0
    %350 = vmatprep.mubr.f32.mxu0 0.0
    %v351 = vand.u32 %v252, 4294901760
    %v352 = vsub.f32 %v252, %v351
    %v353 = vand.u32 %v352, 4294901760
    %v354 = vsub.f32 %v352, %v353
    %v355 = vand.u32 %v354, 4294901760
    %356 = vmatmul.mubr.f32.gmra.mrb[0].mxu0 %v355
    %v357 = vpop.f32.mrb[0].mxu0
    %v358 = vadd.f32 0.0, %v357
    %v359 = vpop.f32.mrb[0].mxu0
    %360 = vdwg.mxu0
    %361 = vmatprep.subr.mxu0 0.0
    %v362 = vand.u32 %v239, 4294901760
    %v363 = vsub.f32 %v239, %v362
    %v364 = vand.u32 %v363, 4294901760
    %v365 = vsub.f32 %v363, %v364
    %v366 = vand.u32 %v365, 4294901760
    %367 = vmatpush1.msra.mxu0 %v366
    %368 = vmatprep.subr.mxu0 0.0
    %v369 = vand.u32 %v240, 4294901760
    %v370 = vsub.f32 %v240, %v369
    %v371 = vand.u32 %v370, 4294901760
    %v372 = vsub.f32 %v370, %v371
    %v373 = vand.u32 %v372, 4294901760
    %374 = vmatpush1.msra.mxu0 %v373
    %375 = vmatprep.subr.mxu0 0.0
    %376 = vmatpush1.msra.mxu0 0.0
    %377 = vmatprep.subr.mxu0 0.0
    %378 = vmatpush1.msra.mxu0 0.0
    %379 = vmatprep.subr.mxu0 0.0
    %380 = vmatpush1.msra.mxu0 0.0
    %381 = vmatprep.subr.mxu0 0.0
    %382 = vmatpush1.msra.mxu0 0.0
    %383 = vmatprep.subr.mxu0 0.0
    %384 = vmatpush1.msra.mxu0 0.0
    %385 = vmatprep.subr.mxu0 0.0
    %386 = vmatpush1.msra.mxu0 0.0
    %387 = vmatprep.subr.mxu0 0.0
    %388 = vmatpush1.msra.mxu0 0.0
    %389 = vmatprep.subr.mxu0 0.0
    %390 = vmatpush1.msra.mxu0 0.0
    %391 = vmatprep.subr.mxu0 0.0
    %392 = vmatpush1.msra.mxu0 0.0
    %393 = vmatprep.subr.mxu0 0.0
    %394 = vmatpush1.msra.mxu0 0.0
    %395 = vmatprep.subr.mxu0 0.0
    %396 = vmatpush1.msra.mxu0 0.0
    %397 = vmatprep.subr.mxu0 0.0
    %398 = vmatpush1.msra.mxu0 0.0
    %399 = vmatprep.subr.mxu0 0.0
    %400 = vmatpush1.msra.mxu0 0.0
    %401 = vmatprep.subr.mxu0 0.0
    %402 = vmatpush1.msra.mxu0 0.0
    %403 = vmatprep.subr.mxu0 0.0
    %404 = vmatpush1.msra.mxu0 0.0
    %405 = vmatprep.subr.mxu0 0.0
    %406 = vmatpush1.msra.mxu0 0.0
    %407 = vmatprep.subr.mxu0 0.0
    %408 = vmatpush1.msra.mxu0 0.0
    %409 = vmatprep.subr.mxu0 0.0
    %410 = vmatpush1.msra.mxu0 0.0
    %411 = vmatprep.subr.mxu0 0.0
    %412 = vmatpush1.msra.mxu0 0.0
    %413 = vmatprep.subr.mxu0 0.0
    %414 = vmatpush1.msra.mxu0 0.0
    %415 = vmatprep.subr.mxu0 0.0
    %416 = vmatpush1.msra.mxu0 0.0
    %417 = vmatprep.subr.mxu0 0.0
    %418 = vmatpush1.msra.mxu0 0.0
    %419 = vmatprep.subr.mxu0 0.0
    %420 = vmatpush1.msra.mxu0 0.0
    %421 = vmatprep.subr.mxu0 0.0
    %422 = vmatpush1.msra.mxu0 0.0
    %423 = vmatprep.subr.mxu0 0.0
    %424 = vmatpush1.msra.mxu0 0.0
    %425 = vmatprep.subr.mxu0 0.0
    %426 = vmatpush1.msra.mxu0 0.0
    %427 = vmatprep.subr.mxu0 0.0
    %428 = vmatpush1.msra.mxu0 0.0
    %429 = vmatprep.subr.mxu0 0.0
    %430 = vmatpush1.msra.mxu0 0.0
    %431 = vmatprep.subr.mxu0 0.0
    %432 = vmatpush1.msra.mxu0 0.0
    %433 = vmatprep.subr.mxu0 0.0
    %434 = vmatpush1.msra.mxu0 0.0
    %435 = vmatprep.mubr.f32.mxu0 0.0
    %v436 = vand.u32 %v243, 4294901760
    %437 = vmatmul.mubr.f32.gmra.mrb[0].mxu0 %v436
    %v438 = vpop.f32.mrb[0].mxu0
    %v439 = vadd.f32 %v328, %v438
    %v440 = vpop.f32.mrb[0].mxu0
    %441 = vmatprep.mubr.f32.mxu0 0.0
    %v442 = vand.u32 %v246, 4294901760
    %443 = vmatmul.mubr.f32.gmra.mrb[0].mxu0 %v442
    %v444 = vpop.f32.mrb[0].mxu0
    %v445 = vadd.f32 %v338, %v444
    %v446 = vpop.f32.mrb[0].mxu0
    %447 = vmatprep.mubr.f32.mxu0 0.0
    %v448 = vand.u32 %v249, 4294901760
    %449 = vmatmul.mubr.f32.gmra.mrb[0].mxu0 %v448
    %v450 = vpop.f32.mrb[0].mxu0
    %v451 = vadd.f32 %v348, %v450
    %v452 = vpop.f32.mrb[0].mxu0
    %453 = vmatprep.mubr.f32.mxu0 0.0
    %v454 = vand.u32 %v252, 4294901760
    %455 = vmatmul.mubr.f32.gmra.mrb[0].mxu0 %v454
    %v456 = vpop.f32.mrb[0].mxu0
    %v457 = vadd.f32 %v358, %v456
    %v458 = vpop.f32.mrb[0].mxu0
    %459 = vdwg.mxu0
    %460 = vmatprep.subr.mxu0 0.0
    %v461 = vand.u32 %v239, 4294901760
    %v462 = vsub.f32 %v239, %v461
    %463 = vmatpush1.msra.mxu0 %v462
    %464 = vmatprep.subr.mxu0 0.0
    %v465 = vand.u32 %v240, 4294901760
    %v466 = vsub.f32 %v240, %v465
    %467 = vmatpush1.msra.mxu0 %v466
    %468 = vmatprep.subr.mxu0 0.0
    %469 = vmatpush1.msra.mxu0 0.0
    %470 = vmatprep.subr.mxu0 0.0
    %471 = vmatpush1.msra.mxu0 0.0
    %472 = vmatprep.subr.mxu0 0.0
    %473 = vmatpush1.msra.mxu0 0.0
    %474 = vmatprep.subr.mxu0 0.0
    %475 = vmatpush1.msra.mxu0 0.0
    %476 = vmatprep.subr.mxu0 0.0
    %477 = vmatpush1.msra.mxu0 0.0
    %478 = vmatprep.subr.mxu0 0.0
    %479 = vmatpush1.msra.mxu0 0.0
    %480 = vmatprep.subr.mxu0 0.0
    %481 = vmatpush1.msra.mxu0 0.0
    %482 = vmatprep.subr.mxu0 0.0
    %483 = vmatpush1.msra.mxu0 0.0
    %484 = vmatprep.subr.mxu0 0.0
    %485 = vmatpush1.msra.mxu0 0.0
    %486 = vmatprep.subr.mxu0 0.0
    %487 = vmatpush1.msra.mxu0 0.0
    %488 = vmatprep.subr.mxu0 0.0
    %489 = vmatpush1.msra.mxu0 0.0
    %490 = vmatprep.subr.mxu0 0.0
    %491 = vmatpush1.msra.mxu0 0.0
    %492 = vmatprep.subr.mxu0 0.0
    %493 = vmatpush1.msra.mxu0 0.0
    %494 = vmatprep.subr.mxu0 0.0
    %495 = vmatpush1.msra.mxu0 0.0
    %496 = vmatprep.subr.mxu0 0.0
    %497 = vmatpush1.msra.mxu0 0.0
    %498 = vmatprep.subr.mxu0 0.0
    %499 = vmatpush1.msra.mxu0 0.0
    %500 = vmatprep.subr.mxu0 0.0
    %501 = vmatpush1.msra.mxu0 0.0
    %502 = vmatprep.subr.mxu0 0.0
    %503 = vmatpush1.msra.mxu0 0.0
    %504 = vmatprep.subr.mxu0 0.0
    %505 = vmatpush1.msra.mxu0 0.0
    %506 = vmatprep.subr.mxu0 0.0
    %507 = vmatpush1.msra.mxu0 0.0
    %508 = vmatprep.subr.mxu0 0.0
    %509 = vmatpush1.msra.mxu0 0.0
    %510 = vmatprep.subr.mxu0 0.0
    %511 = vmatpush1.msra.mxu0 0.0
    %512 = vmatprep.subr.mxu0 0.0
    %513 = vmatpush1.msra.mxu0 0.0
    %514 = vmatprep.subr.mxu0 0.0
    %515 = vmatpush1.msra.mxu0 0.0
    %516 = vmatprep.subr.mxu0 0.0
    %517 = vmatpush1.msra.mxu0 0.0
    %518 = vmatprep.subr.mxu0 0.0
    %519 = vmatpush1.msra.mxu0 0.0
    %520 = vmatprep.subr.mxu0 0.0
    %521 = vmatpush1.msra.mxu0 0.0
    %522 = vmatprep.subr.mxu0 0.0
    %523 = vmatpush1.msra.mxu0 0.0
    %524 = vmatprep.subr.mxu0 0.0
    %525 = vmatpush1.msra.mxu0 0.0
    %526 = vmatprep.subr.mxu0 0.0
    %527 = vmatpush1.msra.mxu0 0.0
    %528 = vmatprep.mubr.f32.mxu0 0.0
    %v529 = vand.u32 %v243, 4294901760
    %v530 = vsub.f32 %v243, %v529
    %531 = vmatmul.mubr.f32.gmra.mrb[0].mxu0 %v530
    %v532 = vpop.f32.mrb[0].mxu0
    %v533 = vadd.f32 %v439, %v532
    %v534 = vpop.f32.mrb[0].mxu0
    %535 = vmatprep.mubr.f32.mxu0 0.0
    %v536 = vand.u32 %v246, 4294901760
    %v537 = vsub.f32 %v246, %v536
    %538 = vmatmul.mubr.f32.gmra.mrb[0].mxu0 %v537
    %v539 = vpop.f32.mrb[0].mxu0
    %v540 = vadd.f32 %v445, %v539
    %v541 = vpop.f32.mrb[0].mxu0
    %542 = vmatprep.mubr.f32.mxu0 0.0
    %v543 = vand.u32 %v249, 4294901760
    %v544 = vsub.f32 %v249, %v543
    %545 = vmatmul.mubr.f32.gmra.mrb[0].mxu0 %v544
    %v546 = vpop.f32.mrb[0].mxu0
    %v547 = vadd.f32 %v451, %v546
    %v548 = vpop.f32.mrb[0].mxu0
    %549 = vmatprep.mubr.f32.mxu0 0.0
    %v550 = vand.u32 %v252, 4294901760
    %v551 = vsub.f32 %v252, %v550
    %552 = vmatmul.mubr.f32.gmra.mrb[0].mxu0 %v551
    %v553 = vpop.f32.mrb[0].mxu0
    %v554 = vadd.f32 %v457, %v553
    %v555 = vpop.f32.mrb[0].mxu0
    %556 = vdwg.mxu0
    %557 = vmatprep.subr.mxu0 0.0
    %v558 = vand.u32 %v239, 4294901760
    %559 = vmatpush1.msra.mxu0 %v558
    %560 = vmatprep.subr.mxu0 0.0
    %v561 = vand.u32 %v240, 4294901760
    %562 = vmatpush1.msra.mxu0 %v561
    %563 = vmatprep.subr.mxu0 0.0
    %564 = vmatpush1.msra.mxu0 0.0
    %565 = vmatprep.subr.mxu0 0.0
    %566 = vmatpush1.msra.mxu0 0.0
    %567 = vmatprep.subr.mxu0 0.0
    %568 = vmatpush1.msra.mxu0 0.0
    %569 = vmatprep.subr.mxu0 0.0
    %570 = vmatpush1.msra.mxu0 0.0
    %571 = vmatprep.subr.mxu0 0.0
    %572 = vmatpush1.msra.mxu0 0.0
    %573 = vmatprep.subr.mxu0 0.0
    %574 = vmatpush1.msra.mxu0 0.0
    %575 = vmatprep.subr.mxu0 0.0
    %576 = vmatpush1.msra.mxu0 0.0
    %577 = vmatprep.subr.mxu0 0.0
    %578 = vmatpush1.msra.mxu0 0.0
    %579 = vmatprep.subr.mxu0 0.0
    %580 = vmatpush1.msra.mxu0 0.0
    %581 = vmatprep.subr.mxu0 0.0
    %582 = vmatpush1.msra.mxu0 0.0
    %583 = vmatprep.subr.mxu0 0.0
    %584 = vmatpush1.msra.mxu0 0.0
    %585 = vmatprep.subr.mxu0 0.0
    %586 = vmatpush1.msra.mxu0 0.0
    %587 = vmatprep.subr.mxu0 0.0
    %588 = vmatpush1.msra.mxu0 0.0
    %589 = vmatprep.subr.mxu0 0.0
    %590 = vmatpush1.msra.mxu0 0.0
    %591 = vmatprep.subr.mxu0 0.0
    %592 = vmatpush1.msra.mxu0 0.0
    %593 = vmatprep.subr.mxu0 0.0
    %594 = vmatpush1.msra.mxu0 0.0
    %595 = vmatprep.subr.mxu0 0.0
    %596 = vmatpush1.msra.mxu0 0.0
    %597 = vmatprep.subr.mxu0 0.0
    %598 = vmatpush1.msra.mxu0 0.0
    %599 = vmatprep.subr.mxu0 0.0
    %600 = vmatpush1.msra.mxu0 0.0
    %601 = vmatprep.subr.mxu0 0.0
    %602 = vmatpush1.msra.mxu0 0.0
    %603 = vmatprep.subr.mxu0 0.0
    %604 = vmatpush1.msra.mxu0 0.0
    %605 = vmatprep.subr.mxu0 0.0
    %606 = vmatpush1.msra.mxu0 0.0
    %607 = vmatprep.subr.mxu0 0.0
    %608 = vmatpush1.msra.mxu0 0.0
    %609 = vmatprep.subr.mxu0 0.0
    %610 = vmatpush1.msra.mxu0 0.0
    %611 = vmatprep.subr.mxu0 0.0
    %612 = vmatpush1.msra.mxu0 0.0
    %613 = vmatprep.subr.mxu0 0.0
    %614 = vmatpush1.msra.mxu0 0.0
    %615 = vmatprep.subr.mxu0 0.0
    %616 = vmatpush1.msra.mxu0 0.0
    %617 = vmatprep.subr.mxu0 0.0
    %618 = vmatpush1.msra.mxu0 0.0
    %619 = vmatprep.subr.mxu0 0.0
    %620 = vmatpush1.msra.mxu0 0.0
    %621 = vmatprep.subr.mxu0 0.0
    %622 = vmatpush1.msra.mxu0 0.0
    %623 = vmatprep.mubr.f32.mxu0 0.0
    %v624 = vand.u32 %v243, 4294901760
    %v625 = vsub.f32 %v243, %v624
    %v626 = vand.u32 %v625, 4294901760
    %627 = vmatmul.mubr.f32.gmra.mrb[0].mxu0 %v626
    %v628 = vpop.f32.mrb[0].mxu0
    %v629 = vadd.f32 %v533, %v628
    %v630 = vpop.f32.mrb[0].mxu0
    %631 = vmatprep.mubr.f32.mxu0 0.0
    %v632 = vand.u32 %v246, 4294901760
    %v633 = vsub.f32 %v246, %v632
    %v634 = vand.u32 %v633, 4294901760
    %635 = vmatmul.mubr.f32.gmra.mrb[0].mxu0 %v634
    %v636 = vpop.f32.mrb[0].mxu0
    %v637 = vadd.f32 %v540, %v636
    %v638 = vpop.f32.mrb[0].mxu0
    %639 = vmatprep.mubr.f32.mxu0 0.0
    %v640 = vand.u32 %v249, 4294901760
    %v641 = vsub.f32 %v249, %v640
    %v642 = vand.u32 %v641, 4294901760
    %643 = vmatmul.mubr.f32.gmra.mrb[0].mxu0 %v642
    %v644 = vpop.f32.mrb[0].mxu0
    %v645 = vadd.f32 %v547, %v644
    %v646 = vpop.f32.mrb[0].mxu0
    %647 = vmatprep.mubr.f32.mxu0 0.0
    %v648 = vand.u32 %v252, 4294901760
    %v649 = vsub.f32 %v252, %v648
    %v650 = vand.u32 %v649, 4294901760
    %651 = vmatmul.mubr.f32.gmra.mrb[0].mxu0 %v650
    %v652 = vpop.f32.mrb[0].mxu0
    %v653 = vadd.f32 %v554, %v652
    %v654 = vpop.f32.mrb[0].mxu0
    %655 = vdwg.mxu0
    %656 = vmatprep.subr.mxu0 0.0
    %v657 = vand.u32 %v239, 4294901760
    %v658 = vsub.f32 %v239, %v657
    %v659 = vand.u32 %v658, 4294901760
    %660 = vmatpush1.msra.mxu0 %v659
    %661 = vmatprep.subr.mxu0 0.0
    %v662 = vand.u32 %v240, 4294901760
    %v663 = vsub.f32 %v240, %v662
    %v664 = vand.u32 %v663, 4294901760
    %665 = vmatpush1.msra.mxu0 %v664
    %666 = vmatprep.subr.mxu0 0.0
    %667 = vmatpush1.msra.mxu0 0.0
    %668 = vmatprep.subr.mxu0 0.0
    %669 = vmatpush1.msra.mxu0 0.0
    %670 = vmatprep.subr.mxu0 0.0
    %671 = vmatpush1.msra.mxu0 0.0
    %672 = vmatprep.subr.mxu0 0.0
    %673 = vmatpush1.msra.mxu0 0.0
    %674 = vmatprep.subr.mxu0 0.0
    %675 = vmatpush1.msra.mxu0 0.0
    %676 = vmatprep.subr.mxu0 0.0
    %677 = vmatpush1.msra.mxu0 0.0
    %678 = vmatprep.subr.mxu0 0.0
    %679 = vmatpush1.msra.mxu0 0.0
    %680 = vmatprep.subr.mxu0 0.0
    %681 = vmatpush1.msra.mxu0 0.0
    %682 = vmatprep.subr.mxu0 0.0
    %683 = vmatpush1.msra.mxu0 0.0
    %684 = vmatprep.subr.mxu0 0.0
    %685 = vmatpush1.msra.mxu0 0.0
    %686 = vmatprep.subr.mxu0 0.0
    %687 = vmatpush1.msra.mxu0 0.0
    %688 = vmatprep.subr.mxu0 0.0
    %689 = vmatpush1.msra.mxu0 0.0
    %690 = vmatprep.subr.mxu0 0.0
    %691 = vmatpush1.msra.mxu0 0.0
    %692 = vmatprep.subr.mxu0 0.0
    %693 = vmatpush1.msra.mxu0 0.0
    %694 = vmatprep.subr.mxu0 0.0
    %695 = vmatpush1.msra.mxu0 0.0
    %696 = vmatprep.subr.mxu0 0.0
    %697 = vmatpush1.msra.mxu0 0.0
    %698 = vmatprep.subr.mxu0 0.0
    %699 = vmatpush1.msra.mxu0 0.0
    %700 = vmatprep.subr.mxu0 0.0
    %701 = vmatpush1.msra.mxu0 0.0
    %702 = vmatprep.subr.mxu0 0.0
    %703 = vmatpush1.msra.mxu0 0.0
    %704 = vmatprep.subr.mxu0 0.0
    %705 = vmatpush1.msra.mxu0 0.0
    %706 = vmatprep.subr.mxu0 0.0
    %707 = vmatpush1.msra.mxu0 0.0
    %708 = vmatprep.subr.mxu0 0.0
    %709 = vmatpush1.msra.mxu0 0.0
    %710 = vmatprep.subr.mxu0 0.0
    %711 = vmatpush1.msra.mxu0 0.0
    %712 = vmatprep.subr.mxu0 0.0
    %713 = vmatpush1.msra.mxu0 0.0
    %714 = vmatprep.subr.mxu0 0.0
    %715 = vmatpush1.msra.mxu0 0.0
    %716 = vmatprep.subr.mxu0 0.0
    %717 = vmatpush1.msra.mxu0 0.0
    %718 = vmatprep.subr.mxu0 0.0
    %719 = vmatpush1.msra.mxu0 0.0
    %720 = vmatprep.subr.mxu0 0.0
    %721 = vmatpush1.msra.mxu0 0.0
    %722 = vmatprep.subr.mxu0 0.0
    %723 = vmatpush1.msra.mxu0 0.0
    %724 = vmatprep.subr.mxu0 0.0
    %725 = vmatpush1.msra.mxu0 0.0
    %726 = vmatprep.mubr.f32.mxu0 0.0
    %v727 = vand.u32 %v243, 4294901760
    %728 = vmatmul.mubr.f32.gmra.mrb[0].mxu0 %v727
    %v729 = vpop.f32.mrb[0].mxu0
    %v730 = vadd.f32 %v629, %v729
    %v731 = vpop.f32.mrb[0].mxu0
    %732 = vmatprep.mubr.f32.mxu0 0.0
    %v733 = vand.u32 %v246, 4294901760
    %734 = vmatmul.mubr.f32.gmra.mrb[0].mxu0 %v733
    %v735 = vpop.f32.mrb[0].mxu0
    %v736 = vadd.f32 %v637, %v735
    %v737 = vpop.f32.mrb[0].mxu0
    %738 = vmatprep.mubr.f32.mxu0 0.0
    %v739 = vand.u32 %v249, 4294901760
    %740 = vmatmul.mubr.f32.gmra.mrb[0].mxu0 %v739
    %v741 = vpop.f32.mrb[0].mxu0
    %v742 = vadd.f32 %v645, %v741
    %v743 = vpop.f32.mrb[0].mxu0
    %744 = vmatprep.mubr.f32.mxu0 0.0
    %v745 = vand.u32 %v252, 4294901760
    %746 = vmatmul.mubr.f32.gmra.mrb[0].mxu0 %v745
    %v747 = vpop.f32.mrb[0].mxu0
    %v748 = vadd.f32 %v653, %v747
    %v749 = vpop.f32.mrb[0].mxu0
    %750 = vdwg.mxu0
    %751 = vmatprep.subr.mxu0 0.0
    %v752 = vand.u32 %v239, 4294901760
    %753 = vmatpush1.msra.mxu0 %v752
    %754 = vmatprep.subr.mxu0 0.0
    %v755 = vand.u32 %v240, 4294901760
    %756 = vmatpush1.msra.mxu0 %v755
    %757 = vmatprep.subr.mxu0 0.0
    %758 = vmatpush1.msra.mxu0 0.0
    %759 = vmatprep.subr.mxu0 0.0
    %760 = vmatpush1.msra.mxu0 0.0
    %761 = vmatprep.subr.mxu0 0.0
    %762 = vmatpush1.msra.mxu0 0.0
    %763 = vmatprep.subr.mxu0 0.0
    %764 = vmatpush1.msra.mxu0 0.0
    %765 = vmatprep.subr.mxu0 0.0
    %766 = vmatpush1.msra.mxu0 0.0
    %767 = vmatprep.subr.mxu0 0.0
    %768 = vmatpush1.msra.mxu0 0.0
    %769 = vmatprep.subr.mxu0 0.0
    %770 = vmatpush1.msra.mxu0 0.0
    %771 = vmatprep.subr.mxu0 0.0
    %772 = vmatpush1.msra.mxu0 0.0
    %773 = vmatprep.subr.mxu0 0.0
    %774 = vmatpush1.msra.mxu0 0.0
    %775 = vmatprep.subr.mxu0 0.0
    %776 = vmatpush1.msra.mxu0 0.0
    %777 = vmatprep.subr.mxu0 0.0
    %778 = vmatpush1.msra.mxu0 0.0
    %779 = vmatprep.subr.mxu0 0.0
    %780 = vmatpush1.msra.mxu0 0.0
    %781 = vmatprep.subr.mxu0 0.0
    %782 = vmatpush1.msra.mxu0 0.0
    %783 = vmatprep.subr.mxu0 0.0
    %784 = vmatpush1.msra.mxu0 0.0
    %785 = vmatprep.subr.mxu0 0.0
    %786 = vmatpush1.msra.mxu0 0.0
    %787 = vmatprep.subr.mxu0 0.0
    %788 = vmatpush1.msra.mxu0 0.0
    %789 = vmatprep.subr.mxu0 0.0
    %790 = vmatpush1.msra.mxu0 0.0
    %791 = vmatprep.subr.mxu0 0.0
    %792 = vmatpush1.msra.mxu0 0.0
    %793 = vmatprep.subr.mxu0 0.0
    %794 = vmatpush1.msra.mxu0 0.0
    %795 = vmatprep.subr.mxu0 0.0
    %796 = vmatpush1.msra.mxu0 0.0
    %797 = vmatprep.subr.mxu0 0.0
    %798 = vmatpush1.msra.mxu0 0.0
    %799 = vmatprep.subr.mxu0 0.0
    %800 = vmatpush1.msra.mxu0 0.0
    %801 = vmatprep.subr.mxu0 0.0
    %802 = vmatpush1.msra.mxu0 0.0
    %803 = vmatprep.subr.mxu0 0.0
    %804 = vmatpush1.msra.mxu0 0.0
    %805 = vmatprep.subr.mxu0 0.0
    %806 = vmatpush1.msra.mxu0 0.0
    %807 = vmatprep.subr.mxu0 0.0
    %808 = vmatpush1.msra.mxu0 0.0
    %809 = vmatprep.subr.mxu0 0.0
    %810 = vmatpush1.msra.mxu0 0.0
    %811 = vmatprep.subr.mxu0 0.0
    %812 = vmatpush1.msra.mxu0 0.0
    %813 = vmatprep.subr.mxu0 0.0
    %814 = vmatpush1.msra.mxu0 0.0
    %815 = vmatprep.subr.mxu0 0.0
    %816 = vmatpush1.msra.mxu0 0.0
    %817 = vmatprep.mubr.f32.mxu0 0.0
    %v818 = vand.u32 %v243, 4294901760
    %819 = vmatmul.mubr.f32.gmra.mrb[0].mxu0 %v818
    %v820 = vpop.f32.mrb[0].mxu0
    %v821 = vadd.f32 %v730, %v820
    %v822 = vpop.f32.mrb[0].mxu0
    %823 = vmatprep.mubr.f32.mxu0 0.0
    %v824 = vand.u32 %v246, 4294901760
    %825 = vmatmul.mubr.f32.gmra.mrb[0].mxu0 %v824
    %v826 = vpop.f32.mrb[0].mxu0
    %v827 = vadd.f32 %v736, %v826
    %v828 = vpop.f32.mrb[0].mxu0
    %829 = vmatprep.mubr.f32.mxu0 0.0
    %v830 = vand.u32 %v249, 4294901760
    %831 = vmatmul.mubr.f32.gmra.mrb[0].mxu0 %v830
    %v832 = vpop.f32.mrb[0].mxu0
    %v833 = vadd.f32 %v742, %v832
    %v834 = vpop.f32.mrb[0].mxu0
    %835 = vmatprep.mubr.f32.mxu0 0.0
    %v836 = vand.u32 %v252, 4294901760
    %837 = vmatmul.mubr.f32.gmra.mrb[0].mxu0 %v836
    %v838 = vpop.f32.mrb[0].mxu0
    %v839 = vadd.f32 %v748, %v838
    %v840 = vpop.f32.mrb[0].mxu0
    %841 = vdwg.mxu0
    %843 = vset.pattern.permute.xlu0 0
    %844 = vperm.xlu0 %843, %v821
    %v845 = vpop.permute.xlu0 %844
    %848 = vset.pattern.permute.xlu0 0
    %849 = vperm.xlu0 %848, %v827
    %v850 = vpop.permute.xlu0 %849
    %v852 = vlaneseq
    %v853 = vshrl.u32 %v852, 7
    %v854 = vsub.s32 0, %v853
    %v855 = vrot.slane %v238, %v854
    %v856 = vmul.f32 %v845, %v855
    %v857 = vmul.f32 %v850, %v855
    %858 = vset.pattern.permute.xlu0 1
    %859 = vperm.xlu0 %858, %v821
    %v860 = vpop.permute.xlu0 %859
    %862 = vset.pattern.permute.xlu0 1
    %863 = vperm.xlu0 %862, %v827
    %v864 = vpop.permute.xlu0 %863
    %v866 = vlaneseq
    %v867 = vshrl.u32 %v866, 7
    %v868 = vsub.s32 1, %v867
    %v869 = vrot.slane %v238, %v868
    %v870 = vmul.f32 %v860, %v869
    %v871 = vmul.f32 %v864, %v869
    %v872 = vadd.f32 %v856, %v870
    %v873 = vadd.f32 %v857, %v871
    %874 = vset.pattern.permute.xlu0 2
    %875 = vperm.xlu0 %874, %v821
    %v876 = vpop.permute.xlu0 %875
    %878 = vset.pattern.permute.xlu0 2
    %879 = vperm.xlu0 %878, %v827
    %v880 = vpop.permute.xlu0 %879
    %v882 = vlaneseq
    %v883 = vshrl.u32 %v882, 7
    %v884 = vsub.s32 2, %v883
    %v885 = vrot.slane %v238, %v884
    %v886 = vmul.f32 %v876, %v885
    %v887 = vmul.f32 %v880, %v885
    %v888 = vadd.f32 %v872, %v886
    %v889 = vadd.f32 %v873, %v887
    %890 = vset.pattern.permute.xlu0 3
    %891 = vperm.xlu0 %890, %v821
    %v892 = vpop.permute.xlu0 %891
    %894 = vset.pattern.permute.xlu0 3
    %895 = vperm.xlu0 %894, %v827
    %v896 = vpop.permute.xlu0 %895
    %v898 = vlaneseq
    %v899 = vshrl.u32 %v898, 7
    %v900 = vsub.s32 3, %v899
    %v901 = vrot.slane %v238, %v900
    %v902 = vmul.f32 %v892, %v901
    %v903 = vmul.f32 %v896, %v901
    %v904 = vadd.f32 %v888, %v902
    %v905 = vadd.f32 %v889, %v903
    %907 = vset.pattern.permute.xlu0 0
    %908 = vperm.xlu0 %907, %v833
    %v909 = vpop.permute.xlu0 %908
    %912 = vset.pattern.permute.xlu0 0
    %913 = vperm.xlu0 %912, %v839
    %v914 = vpop.permute.xlu0 %913
    %v916 = vlaneseq
    %v917 = vshrl.u32 %v916, 7
    %v918 = vsub.s32 4, %v917
    %v919 = vrot.slane %v238, %v918
    %v920 = vmul.f32 %v909, %v919
    %v921 = vmul.f32 %v914, %v919
    %922 = vset.pattern.permute.xlu0 1
    %923 = vperm.xlu0 %922, %v833
    %v924 = vpop.permute.xlu0 %923
    %926 = vset.pattern.permute.xlu0 1
    %927 = vperm.xlu0 %926, %v839
    %v928 = vpop.permute.xlu0 %927
    %v930 = vlaneseq
    %v931 = vshrl.u32 %v930, 7
    %v932 = vsub.s32 5, %v931
    %v933 = vrot.slane %v238, %v932
    %v934 = vmul.f32 %v924, %v933
    %v935 = vmul.f32 %v928, %v933
    %v936 = vadd.f32 %v920, %v934
    %v937 = vadd.f32 %v921, %v935
    %938 = vset.pattern.permute.xlu0 2
    %939 = vperm.xlu0 %938, %v833
    %v940 = vpop.permute.xlu0 %939
    %942 = vset.pattern.permute.xlu0 2
    %943 = vperm.xlu0 %942, %v839
    %v944 = vpop.permute.xlu0 %943
    %v946 = vlaneseq
    %v947 = vshrl.u32 %v946, 7
    %v948 = vsub.s32 6, %v947
    %v949 = vrot.slane %v238, %v948
    %v950 = vmul.f32 %v940, %v949
    %v951 = vmul.f32 %v944, %v949
    %v952 = vadd.f32 %v936, %v950
    %v953 = vadd.f32 %v937, %v951
    %954 = vset.pattern.permute.xlu0 3
    %955 = vperm.xlu0 %954, %v833
    %v956 = vpop.permute.xlu0 %955
    %958 = vset.pattern.permute.xlu0 3
    %959 = vperm.xlu0 %958, %v839
    %v960 = vpop.permute.xlu0 %959
    %v962 = vlaneseq
    %v963 = vshrl.u32 %v962, 7
    %v964 = vsub.s32 7, %v963
    %v965 = vrot.slane %v238, %v964
    %v966 = vmul.f32 %v956, %v965
    %v967 = vmul.f32 %v960, %v965
    %v968 = vadd.f32 %v952, %v966
    %v969 = vadd.f32 %v953, %v967
    %v970 = vld [vmem:[%s3 + $0x30] sm:$0xff]
    %v971 = vld [vmem:[%s3 + $0x38] sm:$0xff]
    %v972 = vld [vmem:[%s3 + $0x40] sm:$0xff]
    %v973 = vld [vmem:[%s3 + $0x48] sm:$0xff]
    %v974 = vadd.f32 %v904, %v970
    %v975 = vadd.f32 %v905, %v971
    %v976 = vadd.f32 %v968, %v972
    %v977 = vadd.f32 %v969, %v973
    %v978 = vxor.u32 %v974, 2147483648
    %v979 = vxor.u32 %v975, 2147483648
    %v980 = vxor.u32 %v976, 2147483648
    %v981 = vxor.u32 %v977, 2147483648
    %v982 = vmul.f32 %v978, 1.442695
    %v983 = vpow.pop %v982
    %v984 = vmul.f32 %v979, 1.442695
    %v985 = vpow.pop %v984
    %v986 = vmul.f32 %v980, 1.442695
    %v987 = vpow.pop %v986
    %v988 = vmul.f32 %v981, 1.442695
    %v989 = vpow.pop %v988
    %v990 = vadd.f32 %v983, 1.0
    %v991 = vadd.f32 %v985, 1.0
    %v992 = vadd.f32 %v987, 1.0
    %v993 = vadd.f32 %v989, 1.0
    %v994 = vrcp.pop %v990
    %v995 = vmul.f32 1.0, %v994
    %v996 = vrcp.pop %v991
    %v997 = vmul.f32 1.0, %v996
    %v998 = vrcp.pop %v992
    %v999 = vmul.f32 1.0, %v998
    %v1000 = vrcp.pop %v993
    %v1001 = vmul.f32 1.0, %v1000
    %v1002 = vld [vmem:[%s3 + $0x10] sm:$0xff]
    %v1003 = vld [vmem:[%s3 + $0x18] sm:$0xff]
    %v1004 = vld [vmem:[%s3 + $0x20] sm:$0xff]
    %v1005 = vld [vmem:[%s3 + $0x28] sm:$0xff]
    %vm1006 = vcmask 261120
    %v1008 = vsel %vm1006, %v1002, 0
    %v1011 = vsel %vm1006, %v1003, 0
    %v1014 = vsel %vm1006, %v1004, 0
    %v1017 = vsel %vm1006, %v1005, 0
    %1019 = vmatprep.subr.mxu0 0.0
    %v1020 = vand.u32 %v995, 4294901760
    %1021 = vmatpush1.msra.mxu0 %v1020
    %1022 = vmatprep.subr.mxu0 0.0
    %v1023 = vand.u32 %v997, 4294901760
    %1024 = vmatpush1.msra.mxu0 %v1023
    %1025 = vmatprep.subr.mxu0 0.0
    %v1026 = vand.u32 %v999, 4294901760
    %1027 = vmatpush1.msra.mxu0 %v1026
    %1028 = vmatprep.subr.mxu0 0.0
    %v1029 = vand.u32 %v1001, 4294901760
    %1030 = vmatpush1.msra.mxu0 %v1029
    %1031 = vmatprep.subr.mxu0 0.0
    %1032 = vmatpush1.msra.mxu0 0.0
    %1033 = vmatprep.subr.mxu0 0.0
    %1034 = vmatpush1.msra.mxu0 0.0
    %1035 = vmatprep.subr.mxu0 0.0
    %1036 = vmatpush1.msra.mxu0 0.0
    %1037 = vmatprep.subr.mxu0 0.0
    %1038 = vmatpush1.msra.mxu0 0.0
    %1039 = vmatprep.subr.mxu0 0.0
    %1040 = vmatpush1.msra.mxu0 0.0
    %1041 = vmatprep.subr.mxu0 0.0
    %1042 = vmatpush1.msra.mxu0 0.0
    %1043 = vmatprep.subr.mxu0 0.0
    %1044 = vmatpush1.msra.mxu0 0.0
    %1045 = vmatprep.subr.mxu0 0.0
    %1046 = vmatpush1.msra.mxu0 0.0
    %1047 = vmatprep.subr.mxu0 0.0
    %1048 = vmatpush1.msra.mxu0 0.0
    %1049 = vmatprep.subr.mxu0 0.0
    %1050 = vmatpush1.msra.mxu0 0.0
    %1051 = vmatprep.subr.mxu0 0.0
    %1052 = vmatpush1.msra.mxu0 0.0
    %1053 = vmatprep.subr.mxu0 0.0
    %1054 = vmatpush1.msra.mxu0 0.0
    %1055 = vmatprep.subr.mxu0 0.0
    %1056 = vmatpush1.msra.mxu0 0.0
    %1057 = vmatprep.subr.mxu0 0.0
    %1058 = vmatpush1.msra.mxu0 0.0
    %1059 = vmatprep.subr.mxu0 0.0
    %1060 = vmatpush1.msra.mxu0 0.0
    %1061 = vmatprep.subr.mxu0 0.0
    %1062 = vmatpush1.msra.mxu0 0.0
    %1063 = vmatprep.subr.mxu0 0.0
    %1064 = vmatpush1.msra.mxu0 0.0
    %1065 = vmatprep.subr.mxu0 0.0
    %1066 = vmatpush1.msra.mxu0 0.0
    %1067 = vmatprep.subr.mxu0 0.0
    %1068 = vmatpush1.msra.mxu0 0.0
    %1069 = vmatprep.subr.mxu0 0.0
    %1070 = vmatpush1.msra.mxu0 0.0
    %1071 = vmatprep.subr.mxu0 0.0
    %1072 = vmatpush1.msra.mxu0 0.0
    %1073 = vmatprep.subr.mxu0 0.0
    %1074 = vmatpush1.msra.mxu0 0.0
    %1075 = vmatprep.subr.mxu0 0.0
    %1076 = vmatpush1.msra.mxu0 0.0
    %1077 = vmatprep.subr.mxu0 0.0
    %1078 = vmatpush1.msra.mxu0 0.0
    %1079 = vmatprep.subr.mxu0 0.0
    %1080 = vmatpush1.msra.mxu0 0.0
    %1081 = vmatprep.subr.mxu0 0.0
    %1082 = vmatpush1.msra.mxu0 0.0
    %1083 = vmatprep.subr.mxu0 0.0
    %1084 = vmatpush1.msra.mxu0 0.0
    %1085 = vmatprep.subr.mxu0 0.0
    %1086 = vmatpush1.msra.mxu0 0.0
    %1087 = vmatprep.mubr.f32.mxu0 0.0
    %v1088 = vand.u32 %v1008, 4294901760
    %v1089 = vsub.f32 %v1008, %v1088
    %v1090 = vand.u32 %v1089, 4294901760
    %v1091 = vsub.f32 %v1089, %v1090
    %v1092 = vand.u32 %v1091, 4294901760
    %1093 = vmatmul.mubr.f32.gmra.mrb[0].mxu0 %v1092
    %v1094 = vpop.f32.mrb[0].mxu0
    %v1095 = vadd.f32 0.0, %v1094
    %v1096 = vpop.f32.mrb[0].mxu0
    %1097 = vmatprep.mubr.f32.mxu0 0.0
    %v1098 = vand.u32 %v1011, 4294901760
    %v1099 = vsub.f32 %v1011, %v1098
    %v1100 = vand.u32 %v1099, 4294901760
    %v1101 = vsub.f32 %v1099, %v1100
    %v1102 = vand.u32 %v1101, 4294901760
    %1103 = vmatmul.mubr.f32.gmra.mrb[0].mxu0 %v1102
    %v1104 = vpop.f32.mrb[0].mxu0
    %v1105 = vadd.f32 0.0, %v1104
    %v1106 = vpop.f32.mrb[0].mxu0
    %1107 = vmatprep.mubr.f32.mxu0 0.0
    %v1108 = vand.u32 %v1014, 4294901760
    %v1109 = vsub.f32 %v1014, %v1108
    %v1110 = vand.u32 %v1109, 4294901760
    %v1111 = vsub.f32 %v1109, %v1110
    %v1112 = vand.u32 %v1111, 4294901760
    %1113 = vmatmul.mubr.f32.gmra.mrb[0].mxu0 %v1112
    %v1114 = vpop.f32.mrb[0].mxu0
    %v1115 = vadd.f32 0.0, %v1114
    %v1116 = vpop.f32.mrb[0].mxu0
    %1117 = vmatprep.mubr.f32.mxu0 0.0
    %v1118 = vand.u32 %v1017, 4294901760
    %v1119 = vsub.f32 %v1017, %v1118
    %v1120 = vand.u32 %v1119, 4294901760
    %v1121 = vsub.f32 %v1119, %v1120
    %v1122 = vand.u32 %v1121, 4294901760
    %1123 = vmatmul.mubr.f32.gmra.mrb[0].mxu0 %v1122
    %v1124 = vpop.f32.mrb[0].mxu0
    %v1125 = vadd.f32 0.0, %v1124
    %v1126 = vpop.f32.mrb[0].mxu0
    %1127 = vdwg.mxu0
    %1128 = vmatprep.subr.mxu0 0.0
    %v1129 = vand.u32 %v995, 4294901760
    %v1130 = vsub.f32 %v995, %v1129
    %v1131 = vand.u32 %v1130, 4294901760
    %v1132 = vsub.f32 %v1130, %v1131
    %v1133 = vand.u32 %v1132, 4294901760
    %1134 = vmatpush1.msra.mxu0 %v1133
    %1135 = vmatprep.subr.mxu0 0.0
    %v1136 = vand.u32 %v997, 4294901760
    %v1137 = vsub.f32 %v997, %v1136
    %v1138 = vand.u32 %v1137, 4294901760
    %v1139 = vsub.f32 %v1137, %v1138
    %v1140 = vand.u32 %v1139, 4294901760
    %1141 = vmatpush1.msra.mxu0 %v1140
    %1142 = vmatprep.subr.mxu0 0.0
    %v1143 = vand.u32 %v999, 4294901760
    %v1144 = vsub.f32 %v999, %v1143
    %v1145 = vand.u32 %v1144, 4294901760
    %v1146 = vsub.f32 %v1144, %v1145
    %v1147 = vand.u32 %v1146, 4294901760
    %1148 = vmatpush1.msra.mxu0 %v1147
    %1149 = vmatprep.subr.mxu0 0.0
    %v1150 = vand.u32 %v1001, 4294901760
    %v1151 = vsub.f32 %v1001, %v1150
    %v1152 = vand.u32 %v1151, 4294901760
    %v1153 = vsub.f32 %v1151, %v1152
    %v1154 = vand.u32 %v1153, 4294901760
    %1155 = vmatpush1.msra.mxu0 %v1154
    %1156 = vmatprep.subr.mxu0 0.0
    %1157 = vmatpush1.msra.mxu0 0.0
    %1158 = vmatprep.subr.mxu0 0.0
    %1159 = vmatpush1.msra.mxu0 0.0
    %1160 = vmatprep.subr.mxu0 0.0
    %1161 = vmatpush1.msra.mxu0 0.0
    %1162 = vmatprep.subr.mxu0 0.0
    %1163 = vmatpush1.msra.mxu0 0.0
    %1164 = vmatprep.subr.mxu0 0.0
    %1165 = vmatpush1.msra.mxu0 0.0
    %1166 = vmatprep.subr.mxu0 0.0
    %1167 = vmatpush1.msra.mxu0 0.0
    %1168 = vmatprep.subr.mxu0 0.0
    %1169 = vmatpush1.msra.mxu0 0.0
    %1170 = vmatprep.subr.mxu0 0.0
    %1171 = vmatpush1.msra.mxu0 0.0
    %1172 = vmatprep.subr.mxu0 0.0
    %1173 = vmatpush1.msra.mxu0 0.0
    %1174 = vmatprep.subr.mxu0 0.0
    %1175 = vmatpush1.msra.mxu0 0.0
    %1176 = vmatprep.subr.mxu0 0.0
    %1177 = vmatpush1.msra.mxu0 0.0
    %1178 = vmatprep.subr.mxu0 0.0
    %1179 = vmatpush1.msra.mxu0 0.0
    %1180 = vmatprep.subr.mxu0 0.0
    %1181 = vmatpush1.msra.mxu0 0.0
    %1182 = vmatprep.subr.mxu0 0.0
    %1183 = vmatpush1.msra.mxu0 0.0
    %1184 = vmatprep.subr.mxu0 0.0
    %1185 = vmatpush1.msra.mxu0 0.0
    %1186 = vmatprep.subr.mxu0 0.0
    %1187 = vmatpush1.msra.mxu0 0.0
    %1188 = vmatprep.subr.mxu0 0.0
    %1189 = vmatpush1.msra.mxu0 0.0
    %1190 = vmatprep.subr.mxu0 0.0
    %1191 = vmatpush1.msra.mxu0 0.0
    %1192 = vmatprep.subr.mxu0 0.0
    %1193 = vmatpush1.msra.mxu0 0.0
    %1194 = vmatprep.subr.mxu0 0.0
    %1195 = vmatpush1.msra.mxu0 0.0
    %1196 = vmatprep.subr.mxu0 0.0
    %1197 = vmatpush1.msra.mxu0 0.0
    %1198 = vmatprep.subr.mxu0 0.0
    %1199 = vmatpush1.msra.mxu0 0.0
    %1200 = vmatprep.subr.mxu0 0.0
    %1201 = vmatpush1.msra.mxu0 0.0
    %1202 = vmatprep.subr.mxu0 0.0
    %1203 = vmatpush1.msra.mxu0 0.0
    %1204 = vmatprep.subr.mxu0 0.0
    %1205 = vmatpush1.msra.mxu0 0.0
    %1206 = vmatprep.subr.mxu0 0.0
    %1207 = vmatpush1.msra.mxu0 0.0
    %1208 = vmatprep.subr.mxu0 0.0
    %1209 = vmatpush1.msra.mxu0 0.0
    %1210 = vmatprep.subr.mxu0 0.0
    %1211 = vmatpush1.msra.mxu0 0.0
    %1212 = vmatprep.mubr.f32.mxu0 0.0
    %v1213 = vand.u32 %v1008, 4294901760
    %1214 = vmatmul.mubr.f32.gmra.mrb[0].mxu0 %v1213
    %v1215 = vpop.f32.mrb[0].mxu0
    %v1216 = vadd.f32 %v1095, %v1215
    %v1217 = vpop.f32.mrb[0].mxu0
    %1218 = vmatprep.mubr.f32.mxu0 0.0
    %v1219 = vand.u32 %v1011, 4294901760
    %1220 = vmatmul.mubr.f32.gmra.mrb[0].mxu0 %v1219
    %v1221 = vpop.f32.mrb[0].mxu0
    %v1222 = vadd.f32 %v1105, %v1221
    %v1223 = vpop.f32.mrb[0].mxu0
    %1224 = vmatprep.mubr.f32.mxu0 0.0
    %v1225 = vand.u32 %v1014, 4294901760
    %1226 = vmatmul.mubr.f32.gmra.mrb[0].mxu0 %v1225
    %v1227 = vpop.f32.mrb[0].mxu0
    %v1228 = vadd.f32 %v1115, %v1227
    %v1229 = vpop.f32.mrb[0].mxu0
    %1230 = vmatprep.mubr.f32.mxu0 0.0
    %v1231 = vand.u32 %v1017, 4294901760
    %1232 = vmatmul.mubr.f32.gmra.mrb[0].mxu0 %v1231
    %v1233 = vpop.f32.mrb[0].mxu0
    %v1234 = vadd.f32 %v1125, %v1233
    %v1235 = vpop.f32.mrb[0].mxu0
    %1236 = vdwg.mxu0
    %1237 = vmatprep.subr.mxu0 0.0
    %v1238 = vand.u32 %v995, 4294901760
    %v1239 = vsub.f32 %v995, %v1238
    %1240 = vmatpush1.msra.mxu0 %v1239
    %1241 = vmatprep.subr.mxu0 0.0
    %v1242 = vand.u32 %v997, 4294901760
    %v1243 = vsub.f32 %v997, %v1242
    %1244 = vmatpush1.msra.mxu0 %v1243
    %1245 = vmatprep.subr.mxu0 0.0
    %v1246 = vand.u32 %v999, 4294901760
    %v1247 = vsub.f32 %v999, %v1246
    %1248 = vmatpush1.msra.mxu0 %v1247
    %1249 = vmatprep.subr.mxu0 0.0
    %v1250 = vand.u32 %v1001, 4294901760
    %v1251 = vsub.f32 %v1001, %v1250
    %1252 = vmatpush1.msra.mxu0 %v1251
    %1253 = vmatprep.subr.mxu0 0.0
    %1254 = vmatpush1.msra.mxu0 0.0
    %1255 = vmatprep.subr.mxu0 0.0
    %1256 = vmatpush1.msra.mxu0 0.0
    %1257 = vmatprep.subr.mxu0 0.0
    %1258 = vmatpush1.msra.mxu0 0.0
    %1259 = vmatprep.subr.mxu0 0.0
    %1260 = vmatpush1.msra.mxu0 0.0
    %1261 = vmatprep.subr.mxu0 0.0
    %1262 = vmatpush1.msra.mxu0 0.0
    %1263 = vmatprep.subr.mxu0 0.0
    %1264 = vmatpush1.msra.mxu0 0.0
    %1265 = vmatprep.subr.mxu0 0.0
    %1266 = vmatpush1.msra.mxu0 0.0
    %1267 = vmatprep.subr.mxu0 0.0
    %1268 = vmatpush1.msra.mxu0 0.0
    %1269 = vmatprep.subr.mxu0 0.0
    %1270 = vmatpush1.msra.mxu0 0.0
    %1271 = vmatprep.subr.mxu0 0.0
    %1272 = vmatpush1.msra.mxu0 0.0
    %1273 = vmatprep.subr.mxu0 0.0
    %1274 = vmatpush1.msra.mxu0 0.0
    %1275 = vmatprep.subr.mxu0 0.0
    %1276 = vmatpush1.msra.mxu0 0.0
    %1277 = vmatprep.subr.mxu0 0.0
    %1278 = vmatpush1.msra.mxu0 0.0
    %1279 = vmatprep.subr.mxu0 0.0
    %1280 = vmatpush1.msra.mxu0 0.0
    %1281 = vmatprep.subr.mxu0 0.0
    %1282 = vmatpush1.msra.mxu0 0.0
    %1283 = vmatprep.subr.mxu0 0.0
    %1284 = vmatpush1.msra.mxu0 0.0
    %1285 = vmatprep.subr.mxu0 0.0
    %1286 = vmatpush1.msra.mxu0 0.0
    %1287 = vmatprep.subr.mxu0 0.0
    %1288 = vmatpush1.msra.mxu0 0.0
    %1289 = vmatprep.subr.mxu0 0.0
    %1290 = vmatpush1.msra.mxu0 0.0
    %1291 = vmatprep.subr.mxu0 0.0
    %1292 = vmatpush1.msra.mxu0 0.0
    %1293 = vmatprep.subr.mxu0 0.0
    %1294 = vmatpush1.msra.mxu0 0.0
    %1295 = vmatprep.subr.mxu0 0.0
    %1296 = vmatpush1.msra.mxu0 0.0
    %1297 = vmatprep.subr.mxu0 0.0
    %1298 = vmatpush1.msra.mxu0 0.0
    %1299 = vmatprep.subr.mxu0 0.0
    %1300 = vmatpush1.msra.mxu0 0.0
    %1301 = vmatprep.subr.mxu0 0.0
    %1302 = vmatpush1.msra.mxu0 0.0
    %1303 = vmatprep.subr.mxu0 0.0
    %1304 = vmatpush1.msra.mxu0 0.0
    %1305 = vmatprep.subr.mxu0 0.0
    %1306 = vmatpush1.msra.mxu0 0.0
    %1307 = vmatprep.subr.mxu0 0.0
    %1308 = vmatpush1.msra.mxu0 0.0
    %1309 = vmatprep.mubr.f32.mxu0 0.0
    %v1310 = vand.u32 %v1008, 4294901760
    %v1311 = vsub.f32 %v1008, %v1310
    %1312 = vmatmul.mubr.f32.gmra.mrb[0].mxu0 %v1311
    %v1313 = vpop.f32.mrb[0].mxu0
    %v1314 = vadd.f32 %v1216, %v1313
    %v1315 = vpop.f32.mrb[0].mxu0
    %1316 = vmatprep.mubr.f32.mxu0 0.0
    %v1317 = vand.u32 %v1011, 4294901760
    %v1318 = vsub.f32 %v1011, %v1317
    %1319 = vmatmul.mubr.f32.gmra.mrb[0].mxu0 %v1318
    %v1320 = vpop.f32.mrb[0].mxu0
    %v1321 = vadd.f32 %v1222, %v1320
    %v1322 = vpop.f32.mrb[0].mxu0
    %1323 = vmatprep.mubr.f32.mxu0 0.0
    %v1324 = vand.u32 %v1014, 4294901760
    %v1325 = vsub.f32 %v1014, %v1324
    %1326 = vmatmul.mubr.f32.gmra.mrb[0].mxu0 %v1325
    %v1327 = vpop.f32.mrb[0].mxu0
    %v1328 = vadd.f32 %v1228, %v1327
    %v1329 = vpop.f32.mrb[0].mxu0
    %1330 = vmatprep.mubr.f32.mxu0 0.0
    %v1331 = vand.u32 %v1017, 4294901760
    %v1332 = vsub.f32 %v1017, %v1331
    %1333 = vmatmul.mubr.f32.gmra.mrb[0].mxu0 %v1332
    %v1334 = vpop.f32.mrb[0].mxu0
    %v1335 = vadd.f32 %v1234, %v1334
    %v1336 = vpop.f32.mrb[0].mxu0
    %1337 = vdwg.mxu0
    %1338 = vmatprep.subr.mxu0 0.0
    %v1339 = vand.u32 %v995, 4294901760
    %1340 = vmatpush1.msra.mxu0 %v1339
    %1341 = vmatprep.subr.mxu0 0.0
    %v1342 = vand.u32 %v997, 4294901760
    %1343 = vmatpush1.msra.mxu0 %v1342
    %1344 = vmatprep.subr.mxu0 0.0
    %v1345 = vand.u32 %v999, 4294901760
    %1346 = vmatpush1.msra.mxu0 %v1345
    %1347 = vmatprep.subr.mxu0 0.0
    %v1348 = vand.u32 %v1001, 4294901760
    %1349 = vmatpush1.msra.mxu0 %v1348
    %1350 = vmatprep.subr.mxu0 0.0
    %1351 = vmatpush1.msra.mxu0 0.0
    %1352 = vmatprep.subr.mxu0 0.0
    %1353 = vmatpush1.msra.mxu0 0.0
    %1354 = vmatprep.subr.mxu0 0.0
    %1355 = vmatpush1.msra.mxu0 0.0
    %1356 = vmatprep.subr.mxu0 0.0
    %1357 = vmatpush1.msra.mxu0 0.0
    %1358 = vmatprep.subr.mxu0 0.0
    %1359 = vmatpush1.msra.mxu0 0.0
    %1360 = vmatprep.subr.mxu0 0.0
    %1361 = vmatpush1.msra.mxu0 0.0
    %1362 = vmatprep.subr.mxu0 0.0
    %1363 = vmatpush1.msra.mxu0 0.0
    %1364 = vmatprep.subr.mxu0 0.0
    %1365 = vmatpush1.msra.mxu0 0.0
    %1366 = vmatprep.subr.mxu0 0.0
    %1367 = vmatpush1.msra.mxu0 0.0
    %1368 = vmatprep.subr.mxu0 0.0
    %1369 = vmatpush1.msra.mxu0 0.0
    %1370 = vmatprep.subr.mxu0 0.0
    %1371 = vmatpush1.msra.mxu0 0.0
    %1372 = vmatprep.subr.mxu0 0.0
    %1373 = vmatpush1.msra.mxu0 0.0
    %1374 = vmatprep.subr.mxu0 0.0
    %1375 = vmatpush1.msra.mxu0 0.0
    %1376 = vmatprep.subr.mxu0 0.0
    %1377 = vmatpush1.msra.mxu0 0.0
    %1378 = vmatprep.subr.mxu0 0.0
    %1379 = vmatpush1.msra.mxu0 0.0
    %1380 = vmatprep.subr.mxu0 0.0
    %1381 = vmatpush1.msra.mxu0 0.0
    %1382 = vmatprep.subr.mxu0 0.0
    %1383 = vmatpush1.msra.mxu0 0.0
    %1384 = vmatprep.subr.mxu0 0.0
    %1385 = vmatpush1.msra.mxu0 0.0
    %1386 = vmatprep.subr.mxu0 0.0
    %1387 = vmatpush1.msra.mxu0 0.0
    %1388 = vmatprep.subr.mxu0 0.0
    %1389 = vmatpush1.msra.mxu0 0.0
    %1390 = vmatprep.subr.mxu0 0.0
    %1391 = vmatpush1.msra.mxu0 0.0
    %1392 = vmatprep.subr.mxu0 0.0
    %1393 = vmatpush1.msra.mxu0 0.0
    %1394 = vmatprep.subr.mxu0 0.0
    %1395 = vmatpush1.msra.mxu0 0.0
    %1396 = vmatprep.subr.mxu0 0.0
    %1397 = vmatpush1.msra.mxu0 0.0
    %1398 = vmatprep.subr.mxu0 0.0
    %1399 = vmatpush1.msra.mxu0 0.0
    %1400 = vmatprep.subr.mxu0 0.0
    %1401 = vmatpush1.msra.mxu0 0.0
    %1402 = vmatprep.subr.mxu0 0.0
    %1403 = vmatpush1.msra.mxu0 0.0
    %1404 = vmatprep.subr.mxu0 0.0
    %1405 = vmatpush1.msra.mxu0 0.0
    %1406 = vmatprep.mubr.f32.mxu0 0.0
    %v1407 = vand.u32 %v1008, 4294901760
    %v1408 = vsub.f32 %v1008, %v1407
    %v1409 = vand.u32 %v1408, 4294901760
    %1410 = vmatmul.mubr.f32.gmra.mrb[0].mxu0 %v1409
    %v1411 = vpop.f32.mrb[0].mxu0
    %v1412 = vadd.f32 %v1314, %v1411
    %v1413 = vpop.f32.mrb[0].mxu0
    %1414 = vmatprep.mubr.f32.mxu0 0.0
    %v1415 = vand.u32 %v1011, 4294901760
    %v1416 = vsub.f32 %v1011, %v1415
    %v1417 = vand.u32 %v1416, 4294901760
    %1418 = vmatmul.mubr.f32.gmra.mrb[0].mxu0 %v1417
    %v1419 = vpop.f32.mrb[0].mxu0
    %v1420 = vadd.f32 %v1321, %v1419
    %v1421 = vpop.f32.mrb[0].mxu0
    %1422 = vmatprep.mubr.f32.mxu0 0.0
    %v1423 = vand.u32 %v1014, 4294901760
    %v1424 = vsub.f32 %v1014, %v1423
    %v1425 = vand.u32 %v1424, 4294901760
    %1426 = vmatmul.mubr.f32.gmra.mrb[0].mxu0 %v1425
    %v1427 = vpop.f32.mrb[0].mxu0
    %v1428 = vadd.f32 %v1328, %v1427
    %v1429 = vpop.f32.mrb[0].mxu0
    %1430 = vmatprep.mubr.f32.mxu0 0.0
    %v1431 = vand.u32 %v1017, 4294901760
    %v1432 = vsub.f32 %v1017, %v1431
    %v1433 = vand.u32 %v1432, 4294901760
    %1434 = vmatmul.mubr.f32.gmra.mrb[0].mxu0 %v1433
    %v1435 = vpop.f32.mrb[0].mxu0
    %v1436 = vadd.f32 %v1335, %v1435
    %v1437 = vpop.f32.mrb[0].mxu0
    %1438 = vdwg.mxu0
    %1439 = vmatprep.subr.mxu0 0.0
    %v1440 = vand.u32 %v995, 4294901760
    %v1441 = vsub.f32 %v995, %v1440
    %v1442 = vand.u32 %v1441, 4294901760
    %1443 = vmatpush1.msra.mxu0 %v1442
    %1444 = vmatprep.subr.mxu0 0.0
    %v1445 = vand.u32 %v997, 4294901760
    %v1446 = vsub.f32 %v997, %v1445
    %v1447 = vand.u32 %v1446, 4294901760
    %1448 = vmatpush1.msra.mxu0 %v1447
    %1449 = vmatprep.subr.mxu0 0.0
    %v1450 = vand.u32 %v999, 4294901760
    %v1451 = vsub.f32 %v999, %v1450
    %v1452 = vand.u32 %v1451, 4294901760
    %1453 = vmatpush1.msra.mxu0 %v1452
    %1454 = vmatprep.subr.mxu0 0.0
    %v1455 = vand.u32 %v1001, 4294901760
    %v1456 = vsub.f32 %v1001, %v1455
    %v1457 = vand.u32 %v1456, 4294901760
    %1458 = vmatpush1.msra.mxu0 %v1457
    %1459 = vmatprep.subr.mxu0 0.0
    %1460 = vmatpush1.msra.mxu0 0.0
    %1461 = vmatprep.subr.mxu0 0.0
    %1462 = vmatpush1.msra.mxu0 0.0
    %1463 = vmatprep.subr.mxu0 0.0
    %1464 = vmatpush1.msra.mxu0 0.0
    %1465 = vmatprep.subr.mxu0 0.0
    %1466 = vmatpush1.msra.mxu0 0.0
    %1467 = vmatprep.subr.mxu0 0.0
    %1468 = vmatpush1.msra.mxu0 0.0
    %1469 = vmatprep.subr.mxu0 0.0
    %1470 = vmatpush1.msra.mxu0 0.0
    %1471 = vmatprep.subr.mxu0 0.0
    %1472 = vmatpush1.msra.mxu0 0.0
    %1473 = vmatprep.subr.mxu0 0.0
    %1474 = vmatpush1.msra.mxu0 0.0
    %1475 = vmatprep.subr.mxu0 0.0
    %1476 = vmatpush1.msra.mxu0 0.0
    %1477 = vmatprep.subr.mxu0 0.0
    %1478 = vmatpush1.msra.mxu0 0.0
    %1479 = vmatprep.subr.mxu0 0.0
    %1480 = vmatpush1.msra.mxu0 0.0
    %1481 = vmatprep.subr.mxu0 0.0
    %1482 = vmatpush1.msra.mxu0 0.0
    %1483 = vmatprep.subr.mxu0 0.0
    %1484 = vmatpush1.msra.mxu0 0.0
    %1485 = vmatprep.subr.mxu0 0.0
    %1486 = vmatpush1.msra.mxu0 0.0
    %1487 = vmatprep.subr.mxu0 0.0
    %1488 = vmatpush1.msra.mxu0 0.0
    %1489 = vmatprep.subr.mxu0 0.0
    %1490 = vmatpush1.msra.mxu0 0.0
    %1491 = vmatprep.subr.mxu0 0.0
    %1492 = vmatpush1.msra.mxu0 0.0
    %1493 = vmatprep.subr.mxu0 0.0
    %1494 = vmatpush1.msra.mxu0 0.0
    %1495 = vmatprep.subr.mxu0 0.0
    %1496 = vmatpush1.msra.mxu0 0.0
    %1497 = vmatprep.subr.mxu0 0.0
    %1498 = vmatpush1.msra.mxu0 0.0
    %1499 = vmatprep.subr.mxu0 0.0
    %1500 = vmatpush1.msra.mxu0 0.0
    %1501 = vmatprep.subr.mxu0 0.0
    %1502 = vmatpush1.msra.mxu0 0.0
    %1503 = vmatprep.subr.mxu0 0.0
    %1504 = vmatpush1.msra.mxu0 0.0
    %1505 = vmatprep.subr.mxu0 0.0
    %1506 = vmatpush1.msra.mxu0 0.0
    %1507 = vmatprep.subr.mxu0 0.0
    %1508 = vmatpush1.msra.mxu0 0.0
    %1509 = vmatprep.subr.mxu0 0.0
    %1510 = vmatpush1.msra.mxu0 0.0
    %1511 = vmatprep.subr.mxu0 0.0
    %1512 = vmatpush1.msra.mxu0 0.0
    %1513 = vmatprep.subr.mxu0 0.0
    %1514 = vmatpush1.msra.mxu0 0.0
    %1515 = vmatprep.mubr.f32.mxu0 0.0
    %v1516 = vand.u32 %v1008, 4294901760
    %1517 = vmatmul.mubr.f32.gmra.mrb[0].mxu0 %v1516
    %v1518 = vpop.f32.mrb[0].mxu0
    %v1519 = vadd.f32 %v1412, %v1518
    %v1520 = vpop.f32.mrb[0].mxu0
    %1521 = vmatprep.mubr.f32.mxu0 0.0
    %v1522 = vand.u32 %v1011, 4294901760
    %1523 = vmatmul.mubr.f32.gmra.mrb[0].mxu0 %v1522
    %v1524 = vpop.f32.mrb[0].mxu0
    %v1525 = vadd.f32 %v1420, %v1524
    %v1526 = vpop.f32.mrb[0].mxu0
    %1527 = vmatprep.mubr.f32.mxu0 0.0
    %v1528 = vand.u32 %v1014, 4294901760
    %1529 = vmatmul.mubr.f32.gmra.mrb[0].mxu0 %v1528
    %v1530 = vpop.f32.mrb[0].mxu0
    %v1531 = vadd.f32 %v1428, %v1530
    %v1532 = vpop.f32.mrb[0].mxu0
    %1533 = vmatprep.mubr.f32.mxu0 0.0
    %v1534 = vand.u32 %v1017, 4294901760
    %1535 = vmatmul.mubr.f32.gmra.mrb[0].mxu0 %v1534
    %v1536 = vpop.f32.mrb[0].mxu0
    %v1537 = vadd.f32 %v1436, %v1536
    %v1538 = vpop.f32.mrb[0].mxu0
    %1539 = vdwg.mxu0
    %1540 = vmatprep.subr.mxu0 0.0
    %v1541 = vand.u32 %v995, 4294901760
    %1542 = vmatpush1.msra.mxu0 %v1541
    %1543 = vmatprep.subr.mxu0 0.0
    %v1544 = vand.u32 %v997, 4294901760
    %1545 = vmatpush1.msra.mxu0 %v1544
    %1546 = vmatprep.subr.mxu0 0.0
    %v1547 = vand.u32 %v999, 4294901760
    %1548 = vmatpush1.msra.mxu0 %v1547
    %1549 = vmatprep.subr.mxu0 0.0
    %v1550 = vand.u32 %v1001, 4294901760
    %1551 = vmatpush1.msra.mxu0 %v1550
    %1552 = vmatprep.subr.mxu0 0.0
    %1553 = vmatpush1.msra.mxu0 0.0
    %1554 = vmatprep.subr.mxu0 0.0
    %1555 = vmatpush1.msra.mxu0 0.0
    %1556 = vmatprep.subr.mxu0 0.0
    %1557 = vmatpush1.msra.mxu0 0.0
    %1558 = vmatprep.subr.mxu0 0.0
    %1559 = vmatpush1.msra.mxu0 0.0
    %1560 = vmatprep.subr.mxu0 0.0
    %1561 = vmatpush1.msra.mxu0 0.0
    %1562 = vmatprep.subr.mxu0 0.0
    %1563 = vmatpush1.msra.mxu0 0.0
    %1564 = vmatprep.subr.mxu0 0.0
    %1565 = vmatpush1.msra.mxu0 0.0
    %1566 = vmatprep.subr.mxu0 0.0
    %1567 = vmatpush1.msra.mxu0 0.0
    %1568 = vmatprep.subr.mxu0 0.0
    %1569 = vmatpush1.msra.mxu0 0.0
    %1570 = vmatprep.subr.mxu0 0.0
    %1571 = vmatpush1.msra.mxu0 0.0
    %1572 = vmatprep.subr.mxu0 0.0
    %1573 = vmatpush1.msra.mxu0 0.0
    %1574 = vmatprep.subr.mxu0 0.0
    %1575 = vmatpush1.msra.mxu0 0.0
    %1576 = vmatprep.subr.mxu0 0.0
    %1577 = vmatpush1.msra.mxu0 0.0
    %1578 = vmatprep.subr.mxu0 0.0
    %1579 = vmatpush1.msra.mxu0 0.0
    %1580 = vmatprep.subr.mxu0 0.0
    %1581 = vmatpush1.msra.mxu0 0.0
    %1582 = vmatprep.subr.mxu0 0.0
    %1583 = vmatpush1.msra.mxu0 0.0
    %1584 = vmatprep.subr.mxu0 0.0
    %1585 = vmatpush1.msra.mxu0 0.0
    %1586 = vmatprep.subr.mxu0 0.0
    %1587 = vmatpush1.msra.mxu0 0.0
    %1588 = vmatprep.subr.mxu0 0.0
    %1589 = vmatpush1.msra.mxu0 0.0
    %1590 = vmatprep.subr.mxu0 0.0
    %1591 = vmatpush1.msra.mxu0 0.0
    %1592 = vmatprep.subr.mxu0 0.0
    %1593 = vmatpush1.msra.mxu0 0.0
    %1594 = vmatprep.subr.mxu0 0.0
    %1595 = vmatpush1.msra.mxu0 0.0
    %1596 = vmatprep.subr.mxu0 0.0
    %1597 = vmatpush1.msra.mxu0 0.0
    %1598 = vmatprep.subr.mxu0 0.0
    %1599 = vmatpush1.msra.mxu0 0.0
    %1600 = vmatprep.subr.mxu0 0.0
    %1601 = vmatpush1.msra.mxu0 0.0
    %1602 = vmatprep.subr.mxu0 0.0
    %1603 = vmatpush1.msra.mxu0 0.0
    %1604 = vmatprep.subr.mxu0 0.0
    %1605 = vmatpush1.msra.mxu0 0.0
    %1606 = vmatprep.subr.mxu0 0.0
    %1607 = vmatpush1.msra.mxu0 0.0
    %1608 = vmatprep.mubr.f32.mxu0 0.0
    %v1609 = vand.u32 %v1008, 4294901760
    %1610 = vmatmul.mubr.f32.gmra.mrb[0].mxu0 %v1609
    %v1611 = vpop.f32.mrb[0].mxu0
    %v1612 = vadd.f32 %v1519, %v1611
    %v1613 = vpop.f32.mrb[0].mxu0
    %1614 = vmatprep.mubr.f32.mxu0 0.0
    %v1615 = vand.u32 %v1011, 4294901760
    %1616 = vmatmul.mubr.f32.gmra.mrb[0].mxu0 %v1615
    %v1617 = vpop.f32.mrb[0].mxu0
    %v1618 = vadd.f32 %v1525, %v1617
    %v1619 = vpop.f32.mrb[0].mxu0
    %1620 = vmatprep.mubr.f32.mxu0 0.0
    %v1621 = vand.u32 %v1014, 4294901760
    %1622 = vmatmul.mubr.f32.gmra.mrb[0].mxu0 %v1621
    %v1623 = vpop.f32.mrb[0].mxu0
    %v1624 = vadd.f32 %v1531, %v1623
    %v1625 = vpop.f32.mrb[0].mxu0
    %1626 = vmatprep.mubr.f32.mxu0 0.0
    %v1627 = vand.u32 %v1017, 4294901760
    %1628 = vmatmul.mubr.f32.gmra.mrb[0].mxu0 %v1627
    %v1629 = vpop.f32.mrb[0].mxu0
    %v1630 = vadd.f32 %v1537, %v1629
    %v1631 = vpop.f32.mrb[0].mxu0
    %1632 = vdwg.mxu0
    %v1633 = vsel %vm241, %v1612, 0.0
    %v1634 = vsel %vm241, %v1618, 0.0
    %v1635 = vadd.f32 %v1633, %v1634
    %v1636 = vsel %vm241, %v1624, 0.0
    %v1637 = vadd.f32 %v1635, %v1636
    %v1638 = vsel %vm241, %v1630, 0.0
    %v1639 = vadd.f32 %v1637, %v1638
    %v1640 = vrot.slane %v1639, 4
    %v1641 = vadd.f32 %v1639, %v1640
    %v1642 = vrot.slane %v1641, 2
    %v1643 = vadd.f32 %v1641, %v1642
    %v1644 = vrot.slane %v1643, 1
    %v1645 = vadd.f32 %v1643, %v1644
    %v1646 = vrcp.pop 32.0
    %v1647 = vmul.f32 %v1645, %v1646
    %v1648 = vsub.f32 %v1612, %v1647
    %v1649 = vsub.f32 %v1618, %v1647
    %v1650 = vsub.f32 %v1624, %v1647
    %v1651 = vsub.f32 %v1630, %v1647
    %v1652 = vmul.f32 %v1648, %v1648
    %v1653 = vmul.f32 %v1649, %v1649
    %v1654 = vmul.f32 %v1650, %v1650
    %v1655 = vmul.f32 %v1651, %v1651
    %v1656 = vsel %vm241, %v1652, 0.0
    %v1657 = vsel %vm241, %v1653, 0.0
    %v1658 = vadd.f32 %v1656, %v1657
    %v1659 = vsel %vm241, %v1654, 0.0
    %v1660 = vadd.f32 %v1658, %v1659
    %v1661 = vsel %vm241, %v1655, 0.0
    %v1662 = vadd.f32 %v1660, %v1661
    %v1663 = vrot.slane %v1662, 4
    %v1664 = vadd.f32 %v1662, %v1663
    %v1665 = vrot.slane %v1664, 2
    %v1666 = vadd.f32 %v1664, %v1665
    %v1667 = vrot.slane %v1666, 1
    %v1668 = vadd.f32 %v1666, %v1667
    %v1669 = vmul.f32 %v1668, %v1646
    %v1670 = vadd.f32 %v1669, 1e-05
    %v1671 = vrsqrt.pop %v1670
    %v1672 = vmul.f32 %v1648, %v1671
    %v1673 = vmul.f32 %v1649, %v1671
    %v1674 = vmul.f32 %v1650, %v1671
    %v1675 = vmul.f32 %v1651, %v1671
    %v1676 = vld [vmem:[%s3 + $0x50] sm:$0xff]
    %v1677 = vld [vmem:[%s3 + $0x58] sm:$0xff]
    %v1678 = vld [vmem:[%s3 + $0x60] sm:$0xff]
    %v1679 = vld [vmem:[%s3 + $0x68] sm:$0xff]
    %v1680 = vmul.f32 %v1672, %v1676
    %v1681 = vmul.f32 %v1673, %v1677
    %v1682 = vmul.f32 %v1674, %v1678
    %v1683 = vmul.f32 %v1675, %v1679
    %v1684 = vld [vmem:[%s3 + $0x70] sm:$0xff]
    %v1685 = vld [vmem:[%s3 + $0x78] sm:$0xff]
    %v1686 = vld [vmem:[%s3 + $0x80] sm:$0xff]
    %v1687 = vld [vmem:[%s3 + $0x88] sm:$0xff]
    %v1688 = vadd.f32 %v1680, %v1684
    %v1689 = vadd.f32 %v1681, %v1685
    %v1690 = vadd.f32 %v1682, %v1686
    %v1691 = vadd.f32 %v1683, %v1687
    %v1692 = vsel %vm241, %v1688, -inf
    %1693 = vmax.xlane.f32.xlu0 %v1692
    %v1694 = vpop.xlane.xlu0 %1693
    %v1695 = vsel %vm241, %v1689, -inf
    %1696 = vmax.xlane.f32.xlu0 %v1695
    %v1697 = vpop.xlane.xlu0 %1696
    %v1698 = vsel %vm241, %v1690, -inf
    %1699 = vmax.xlane.f32.xlu0 %v1698
    %v1700 = vpop.xlane.xlu0 %1699
    %v1701 = vsel %vm241, %v1691, -inf
    %1702 = vmax.xlane.f32.xlu0 %v1701
    %v1703 = vpop.xlane.xlu0 %1702
    %v1704 = vsub.f32 %v1688, %v1694
    %v1705 = vsub.f32 %v1689, %v1697
    %v1706 = vsub.f32 %v1690, %v1700
    %v1707 = vsub.f32 %v1691, %v1703
    %v1708 = vmul.f32 %v1704, 1.442695
    %v1709 = vpow.pop %v1708
    %v1710 = vmul.f32 %v1705, 1.442695
    %v1711 = vpow.pop %v1710
    %v1712 = vmul.f32 %v1706, 1.442695
    %v1713 = vpow.pop %v1712
    %v1714 = vmul.f32 %v1707, 1.442695
    %v1715 = vpow.pop %v1714
    %v1716 = vsel %vm241, %v1709, 0.0
    %1717 = vadd.xlane.f32.xlu0 %v1716
    %v1718 = vpop.xlane.xlu0 %1717
    %v1719 = vsel %vm241, %v1711, 0.0
    %1720 = vadd.xlane.f32.xlu0 %v1719
    %v1721 = vpop.xlane.xlu0 %1720
    %v1722 = vsel %vm241, %v1713, 0.0
    %1723 = vadd.xlane.f32.xlu0 %v1722
    %v1724 = vpop.xlane.xlu0 %1723
    %v1725 = vsel %vm241, %v1715, 0.0
    %1726 = vadd.xlane.f32.xlu0 %v1725
    %v1727 = vpop.xlane.xlu0 %1726
    %v1728 = vrcp.pop %v1718
    %v1729 = vmul.f32 %v1709, %v1728
    %v1730 = vrcp.pop %v1721
    %v1731 = vmul.f32 %v1711, %v1730
    %v1732 = vrcp.pop %v1724
    %v1733 = vmul.f32 %v1713, %v1732
    %v1734 = vrcp.pop %v1727
    %v1735 = vmul.f32 %v1715, %v1734
    %1736 = vst.msk [vmem:[%s4] sm:$0xff] %vm241, %v1729
    %1737 = vst.msk [vmem:[%s4 + $0x8] sm:$0xff] %vm241, %v1731
    %1738 = vst.msk [vmem:[%s4 + $0x10] sm:$0xff] %vm241, %v1733
    %1739 = vst.msk [vmem:[%s4 + $0x18] sm:$0xff] %vm241, %v1735
    // Predicated region
    $region22: #{tpu_custom_call.1} parent=1 // pred_check
      _
    $region23: #{tpu_custom_call.1} parent=1 // pred_check_branch
      %1741 = sbr.rel (0) target = $region25
    $region24: #{tpu_custom_call.1} parent=1 // pred_region
      _
    $region25: #{tpu_custom_call.1} parent=1 // pred_fallthru
      _
    // Predicated region
    $region26: #{tpu_custom_call.1} parent=1 // pred_check
      _
    $region27: #{tpu_custom_call.1} parent=1 // pred_check_branch
      %1743 = sbr.rel (0) target = $region29
    $region28: #{tpu_custom_call.1} parent=1 // pred_region
      _
    $region29: #{tpu_custom_call.1} parent=1 // pred_fallthru
      _
    %1744 = vsyncpa [#allocation3], 1

</llo_original>
